<compile_context>
chip_gen: v7x
topology: tpu7x:2x2x1
jax: 0.10.0
libtpu: 0.0.40
codegen_flags: <defaults>
</compile_context>

<pallas_src>
import functools

import jax
import jax.numpy as jnp
from jax import lax
from jax.experimental import pallas as pl
from jax.experimental.pallas import tpu as pltpu


# ----------------------------- fused LSTM kernel -----------------------------
def _fused_lstm_kernel(*refs, num_layers, hidden_size, unroll):
    """All LSTM layers + fc head for one time chunk.

    inputs : x (C,Bp,D), h0 (L,Bp,4H), c0 (L,Bp,4H),
             per layer: w_ih (D|4H, 4H), w_hh (4H, 4H), b (1, 4H),
             fc_w (4H, OPAD), fc_b (1, OPAD)
    output : out (C, Bp, OPAD)
    scratch: h_state (L,Bp,4H), c_state (L,Bp,4H)   -- carried across grid steps
             gx (C,Bp,4H), seq (C,Bp,4H)            -- per-chunk workspaces

    Slot layout: activations/state are 4H wide; the "true" h / c live in lanes
    [H, 2H) (slot 1).  Weight matrices have their real rows in [H, 2H) and
    zeros elsewhere, so contractions over the 4H axis are exact.
    """
    L = num_layers
    n_in = 3 + 3 * L + 2
    x_ref, h0_ref, c0_ref = refs[0], refs[1], refs[2]
    layer_refs = refs[3:3 + 3 * L]
    fcw_ref, fcb_ref = refs[3 + 3 * L], refs[4 + 3 * L]
    out_ref = refs[n_in]
    hst_ref, cst_ref, gx_ref, seq_ref = refs[n_in + 1:n_in + 5]

    H = hidden_size
    G = 4 * H
    C, Bp, _ = x_ref.shape

    # First grid step: load the initial hidden / cell state into the carried
    # VMEM scratch.
    @pl.when(pl.program_id(0) == 0)
    def _():
        hst_ref[...] = h0_ref[...]
        cst_ref[...] = c0_ref[...]

    # Per-lane gate-activation constants, built ONCE per grid step and reused
    # by every layer / timestep.  Gate slots are [ i | f | g | o ].
    # tanh(x) = 2*sigmoid(2x) - 1  -> single sigmoid over the full (Bp, 4H)
    # vreg instead of sigmoid + tanh (1 EUP push per step instead of 2).
    lane = lax.broadcasted_iota(jnp.int32, (Bp, G), 1)
    g_mask = (lane >= 2 * H) & (lane < 3 * H)
    gate_scale = jnp.where(g_mask, 2.0, 1.0).astype(jnp.float32)
    gate_shift = jnp.where(g_mask, -1.0, 0.0).astype(jnp.float32)

    for layer in range(L):
        wih_ref, whh_ref, b_ref = layer_refs[3 * layer:3 * layer + 3]

        # ---- hoisted input projection: one GEMM for the whole chunk --------
        if layer == 0:
            inp = x_ref[...]                       # (C, Bp, D) raw inputs
        else:
            inp = seq_ref[...]                     # (C, Bp, 4H) slot layout
        d_in = inp.shape[-1]
        gx = jnp.dot(inp.reshape(C * Bp, d_in), wih_ref[...],
                     preferred_element_type=jnp.float32) + b_ref[...]
        gx_ref[...] = gx.reshape(C, Bp, G)

        # ---- recurrence: only h @ W_hh + gate math on the serial path ------
        whh = whh_ref[...]                         # hoisted load, (4H, 4H)
        h4 = hst_ref[layer]                        # (Bp, 4H), h in slot 1
        c4 = cst_ref[layer]                        # (Bp, 4H), c in slot 1

        def step(t, carry):
            h4, c4 = carry
            gates = gx_ref[t] + jnp.dot(h4, whh,
                                        preferred_element_type=jnp.float32)
            # One EUP push per step: sigma on i/f/o lanes, tanh on g lanes via
            # the 2*sigma(2x)-1 identity (per-lane scale/shift on the VALU).
            act = gate_scale * jax.nn.sigmoid(gates * gate_scale) + gate_shift
            r2 = pltpu.roll(act, shift=2 * H, axis=1)    # [ g | o | i | f ]
            ig = act * r2                                # i*g in slots 0 and 2
            # slot 1:  f*c  +  i*g   (ig is period-2 symmetric, so a roll by H
            # lands i*g on slot 1 regardless of roll direction)
            c4_new = act * c4 + pltpu.roll(ig, shift=H, axis=1)
            # slot 1:  o * tanh(c_new)   (o sits on slot 1 of r2)
            h4_new = r2 * jnp.tanh(c4_new)
            seq_ref[t] = h4_new                          # lane-dense store
            return h4_new, c4_new

        h4, c4 = lax.fori_loop(0, C, step, (h4, c4), unroll=unroll)
        hst_ref[layer] = h4                        # carry state to next chunk
        cst_ref[layer] = c4

    # ---- fc head on this chunk (lane-dense OPAD output, streamed out) ------
    out = jnp.dot(seq_ref[...].reshape(C * Bp, G), fcw_ref[...],
                  preferred_element_type=jnp.float32) + fcb_ref[...]
    out_ref[...] = out.reshape(C, Bp, out_ref.shape[-1])


# ----------------------------- parameter packing -----------------------------
def _rows_to_slot1(w, H):
    """(H, N) -> (4H, N) with the real rows in [H, 2H), zeros elsewhere."""
    z = jnp.zeros_like(w)
    return jnp.concatenate([z, w, z, z], axis=0)


def _vals_to_slot1(a, H):
    """(..., H) -> (..., 4H) with the true values in lanes [H, 2H)."""
    z = jnp.zeros_like(a)
    return jnp.concatenate([z, a, z, z], axis=-1)


def _pack_params(params, out_pad):
    H = params["layers"][0]["w_hh"].shape[0]
    packed = []
    for l, p in enumerate(params["layers"]):
        w_ih = p["w_ih"]
        if l > 0:   # layer input arrives in slot layout -> stack with zero rows
            w_ih = _rows_to_slot1(w_ih, H)
        packed += [w_ih, _rows_to_slot1(p["w_hh"], H), p["b"]]
    O = params["fc_w"].shape[1]
    fc_w = _rows_to_slot1(jnp.pad(params["fc_w"], ((0, 0), (0, out_pad - O))), H)
    fc_b = jnp.pad(params["fc_b"], ((0, 0), (0, out_pad - O)))
    return packed, fc_w, fc_b


def _const_spec(shape):
    """Full-array block whose index never changes (no per-step re-DMA)."""
    nd = len(shape)

    def idx(t):
        return (0,) * nd

    return pl.BlockSpec(shape, idx)


def _pick_time_chunk(T, Bp, D, G, OPAD, budget_bytes=4 << 20):
    """Chunk length so the streamed/per-chunk working set stays ~budget."""
    # double-buffered x + double-buffered out + gx + seq, f32 bytes per step
    per_t = 4 * Bp * (2 * D + 2 * OPAD + 2 * G)
    c = max(1, budget_bytes // per_t)
    return int(min(T, c, 256))


# ------------------------------ Full LSTM model -------------------------------
def init_params(key, input_size, hidden_size, output_size, num_layers):
    """Uniform(-1/sqrt(H), 1/sqrt(H)) init like PyTorch LSTM cells (fused bias)."""
    params = {"layers": []}
    bound = 1.0 / jnp.sqrt(jnp.float32(hidden_size))
    keys = jax.random.split(key, num_layers * 3 + 2)
    for layer in range(num_layers):
        d_in = input_size if layer == 0 else hidden_size
        k_ih, k_hh, k_b = keys[3 * layer:3 * layer + 3]
        params["layers"].append({
            "w_ih": jax.random.uniform(k_ih, (d_in, 4 * hidden_size),
                                       jnp.float32, -bound, bound),
            "w_hh": jax.random.uniform(k_hh, (hidden_size, 4 * hidden_size),
                                       jnp.float32, -bound, bound),
            "b": jax.random.uniform(k_b, (1, 4 * hidden_size),
                                    jnp.float32, -bound, bound),
        })
    k_fw, k_fb = keys[-2:]
    params["fc_w"] = jax.random.uniform(k_fw, (hidden_size, output_size),
                                        jnp.float32, -bound, bound)
    params["fc_b"] = jax.random.uniform(k_fb, (1, output_size),
                                        jnp.float32, -bound, bound)
    return params


def lstm_forward(params, x_btd, h_0=None, c_0=None, chunk=None):
    """x_btd: (B, T, input_size) -> (B, T, output_size). Matches LSTM.forward."""
    B, T, D = x_btd.shape
    L = len(params["layers"])
    H = params["layers"][0]["w_hh"].shape[0]
    G = 4 * H
    O = params["fc_w"].shape[1]
    Bp = max(8, ((B + 7) // 8) * 8)        # fill f32 sublanes / MXU rows
    OPAD = ((O + 127) // 128) * 128        # lane-dense fc output

    if chunk is None:
        chunk = _pick_time_chunk(T, Bp, D, G, OPAD)
    C = int(max(1, min(chunk, T)))
    Tp = ((T + C - 1) // C) * C            # pad time to a multiple of C
    nt = Tp // C
    unroll = min(C, 8)

    if h_0 is None:
        h_0 = jnp.zeros((L, B, H), jnp.float32)
    if c_0 is None:
        c_0 = jnp.zeros((L, B, H), jnp.float32)
    h_0 = jnp.asarray(h_0, jnp.float32)
    c_0 = jnp.asarray(c_0, jnp.float32)

    # time-major + batch/time padding (padded rows/steps are independent and
    # sliced off; the LSTM is causal so trailing time padding never affects
    # the real outputs)
    x_tbd = jnp.pad(jnp.transpose(x_btd, (1, 0, 2)),
                    ((0, Tp - T), (0, Bp - B), (0, 0)))
    h0 = _vals_to_slot1(jnp.pad(h_0, ((0, 0), (0, Bp - B), (0, 0))), H)
    c0 = _vals_to_slot1(jnp.pad(c_0, ((0, 0), (0, Bp - B), (0, 0))), H)

    layer_ws, fc_w, fc_b = _pack_params(params, OPAD)

    in_specs = (
        [pl.BlockSpec((C, Bp, D), lambda t: (t, 0, 0))]        # streamed x
        + [_const_spec(h0.shape), _const_spec(c0.shape)]
        + [_const_spec(tuple(w.shape)) for w in layer_ws]
        + [_const_spec(tuple(fc_w.shape)), _const_spec(tuple(fc_b.shape))]
    )
    out_spec = pl.BlockSpec((C, Bp, OPAD), lambda t: (t, 0, 0))  # streamed out

    kernel = functools.partial(_fused_lstm_kernel, num_layers=L,
                               hidden_size=H, unroll=unroll)

    out = pl.pallas_call(
        kernel,
        out_shape=jax.ShapeDtypeStruct((Tp, Bp, OPAD), jnp.float32),
        grid=(nt,),
        in_specs=in_specs,
        out_specs=out_spec,
        scratch_shapes=[pltpu.VMEM((L, Bp, G), jnp.float32),   # h state (carried)
                        pltpu.VMEM((L, Bp, G), jnp.float32),   # c state (carried)
                        pltpu.VMEM((C, Bp, G), jnp.float32),   # gx (per chunk)
                        pltpu.VMEM((C, Bp, G), jnp.float32)],  # seq (per chunk)
        compiler_params=pltpu.CompilerParams(
            dimension_semantics=("arbitrary",),       # state carried across chunks
            vmem_limit_bytes=32 * 1024 * 1024),
    )(x_tbd, h0, c0, *layer_ws, fc_w, fc_b)

    # Only the small (T, B, O) result is transposed/sliced.
    return jnp.transpose(out[:T, :B, :O], (1, 0, 2))


# ----------------------------- pure-JAX reference -----------------------------
def lstm_reference(params, x_btd, h_0=None, c_0=None):
    B, T, _ = x_btd.shape
    L = len(params["layers"])
    H = params["layers"][0]["w_hh"].shape[0]
    if h_0 is None:
        h_0 = jnp.zeros((L, B, H), jnp.float32)
    if c_0 is None:
        c_0 = jnp.zeros((L, B, H), jnp.float32)
    seq = x_btd
    for l, p in enumerate(params["layers"]):
        h, c = h_0[l], c_0[l]
        outs = []
        for t in range(T):
            gates = seq[:, t] @ p["w_ih"] + h @ p["w_hh"] + p["b"]
            i = jax.nn.sigmoid(gates[:, 0 * H:1 * H])
            f = jax.nn.sigmoid(gates[:, 1 * H:2 * H])
            g = jnp.tanh(gates[:, 2 * H:3 * H])
            o = jax.nn.sigmoid(gates[:, 3 * H:4 * H])
            c = f * c + i * g
            h = o * jnp.tanh(c)
            outs.append(h)
        seq = jnp.stack(outs, axis=1)
    out = seq.reshape(B * T, H) @ params["fc_w"] + params["fc_b"]
    return out.reshape(B, T, -1)


if __name__ == "__main__":
    input_size = 16
    hidden_size = 32
    output_size = 10
    num_layers = 2
    batch = 2
    seq_len = 8

    key = jax.random.PRNGKey(0)
    k_param, k_x = jax.random.split(key)
    params = init_params(k_param, input_size, hidden_size, output_size, num_layers)
    x = jax.random.normal(k_x, (batch, seq_len, input_size), jnp.float32)

    # chunk=4 -> 2 sequential grid steps with h/c carried in VMEM scratch.
    fwd = jax.jit(functools.partial(lstm_forward, chunk=4))
    out = fwd(params, x)
    jax.block_until_ready(out)
    assert out.shape == (batch, seq_len, output_size), out.shape

    ref = lstm_reference(params, x)
    err = float(jnp.max(jnp.abs(out - ref)))
    assert err < 1e-4, f"max abs err vs reference: {err}"

    # Ragged T / padded batch path: T=7 with chunk=4 pads one timestep.
    x2 = jax.random.normal(jax.random.PRNGKey(1), (3, 7, input_size), jnp.float32)
    out2 = jax.jit(functools.partial(lstm_forward, chunk=4))(params, x2)
    jax.block_until_ready(out2)
    ref2 = lstm_reference(params, x2)
    err2 = float(jnp.max(jnp.abs(out2 - ref2)))
    assert err2 < 1e-4, f"max abs err (ragged) vs reference: {err2}"

    print("KERNEL_OK")
</pallas_src>

<mosaic_0001>
module attributes {stable_mosaic.version = 11 : i64} {
  func.func @_fused_lstm_kernel(%arg0: i32, %arg1: memref<4x8x16xf32, #tpu.memory_space<vmem>>, %arg2: memref<2x8x128xf32, #tpu.memory_space<vmem>>, %arg3: memref<2x8x128xf32, #tpu.memory_space<vmem>>, %arg4: memref<16x128xf32, #tpu.memory_space<vmem>>, %arg5: memref<128x128xf32, #tpu.memory_space<vmem>>, %arg6: memref<1x128xf32, #tpu.memory_space<vmem>>, %arg7: memref<128x128xf32, #tpu.memory_space<vmem>>, %arg8: memref<128x128xf32, #tpu.memory_space<vmem>>, %arg9: memref<1x128xf32, #tpu.memory_space<vmem>>, %arg10: memref<128x128xf32, #tpu.memory_space<vmem>>, %arg11: memref<1x128xf32, #tpu.memory_space<vmem>>, %arg12: memref<4x8x128xf32, #tpu.memory_space<vmem>>, %arg13: memref<2x8x128xf32, #tpu.memory_space<vmem>>, %arg14: memref<2x8x128xf32, #tpu.memory_space<vmem>>, %arg15: memref<4x8x128xf32, #tpu.memory_space<vmem>>, %arg16: memref<4x8x128xf32, #tpu.memory_space<vmem>>) attributes {dimension_semantics = [#tpu.dimension_semantics<arbitrary>], iteration_bounds = array<i64: 2>, scalar_prefetch = 0 : i64, scratch_operands = 4 : i64, tpu.core_type = #tpu.core_type<tc>, window_params = [{transform_indices = @transform_0, window_bounds = array<i64: 4, 8, 16>}, {pipeline_mode = #tpu.pipeline_mode<synchronous>, transform_indices = @transform_1, window_bounds = array<i64: 2, 8, 128>}, {pipeline_mode = #tpu.pipeline_mode<synchronous>, transform_indices = @transform_2, window_bounds = array<i64: 2, 8, 128>}, {pipeline_mode = #tpu.pipeline_mode<synchronous>, transform_indices = @transform_3, window_bounds = array<i64: 16, 128>}, {pipeline_mode = #tpu.pipeline_mode<synchronous>, transform_indices = @transform_4, window_bounds = array<i64: 128, 128>}, {pipeline_mode = #tpu.pipeline_mode<synchronous>, transform_indices = @transform_5, window_bounds = array<i64: 1, 128>}, {pipeline_mode = #tpu.pipeline_mode<synchronous>, transform_indices = @transform_6, window_bounds = array<i64: 128, 128>}, {pipeline_mode = #tpu.pipeline_mode<synchronous>, transform_indices = @transform_7, window_bounds = array<i64: 128, 128>}, {pipeline_mode = #tpu.pipeline_mode<synchronous>, transform_indices = @transform_8, window_bounds = array<i64: 1, 128>}, {pipeline_mode = #tpu.pipeline_mode<synchronous>, transform_indices = @transform_9, window_bounds = array<i64: 128, 128>}, {pipeline_mode = #tpu.pipeline_mode<synchronous>, transform_indices = @transform_10, window_bounds = array<i64: 1, 128>}, {transform_indices = @transform_11, window_bounds = array<i64: 4, 8, 128>}]} {
    %c0_i32 = arith.constant 0 : i32
    %0 = arith.cmpi eq, %arg0, %c0_i32 : i32
    %1 = arith.extui %0 : i1 to i32
    %c0_i32_0 = arith.constant 0 : i32
    %2 = arith.cmpi ne, %1, %c0_i32_0 : i32
    scf.if %2 {
      %c0_132 = arith.constant 0 : index
      %c0_133 = arith.constant 0 : index
      %c0_134 = arith.constant 0 : index
      %256 = vector.load %arg2[%c0_132, %c0_133, %c0_134] : memref<2x8x128xf32, #tpu.memory_space<vmem>>, vector<2x8x128xf32>
      %c0_135 = arith.constant 0 : index
      %c0_136 = arith.constant 0 : index
      %c0_137 = arith.constant 0 : index
      %257 = vector.load %arg13[%c0_135, %c0_136, %c0_137] : memref<2x8x128xf32, #tpu.memory_space<vmem>>, vector<2x8x128xf32>
      tpu.vector_store %arg13[%c0_135, %c0_136, %c0_137], %256 {strides = array<i32>} : memref<2x8x128xf32, #tpu.memory_space<vmem>>, vector<2x8x128xf32>,
      %c0_138 = arith.constant 0 : index
      %c0_139 = arith.constant 0 : index
      %c0_140 = arith.constant 0 : index
      %258 = vector.load %arg3[%c0_138, %c0_139, %c0_140] : memref<2x8x128xf32, #tpu.memory_space<vmem>>, vector<2x8x128xf32>
      %c0_141 = arith.constant 0 : index
      %c0_142 = arith.constant 0 : index
      %c0_143 = arith.constant 0 : index
      %259 = vector.load %arg14[%c0_141, %c0_142, %c0_143] : memref<2x8x128xf32, #tpu.memory_space<vmem>>, vector<2x8x128xf32>
      tpu.vector_store %arg14[%c0_141, %c0_142, %c0_143], %258 {strides = array<i32>} : memref<2x8x128xf32, #tpu.memory_space<vmem>>, vector<2x8x128xf32>,
    } else {
    }
    %3 = tpu.iota {dimensions = array<i32: 1>} : vector<8x128xi32>
    %c64_i32 = arith.constant 64 : i32
    %4 = vector.broadcast %c64_i32 : i32 to vector<8x128xi32>
    %5 = arith.cmpi sge, %3, %4 : vector<8x128xi32>
    %c96_i32 = arith.constant 96 : i32
    %6 = vector.broadcast %c96_i32 : i32 to vector<8x128xi32>
    %7 = arith.cmpi slt, %3, %6 : vector<8x128xi32>
    %8 = arith.andi %5, %7 : vector<8x128xi1>
    %cst = arith.constant 2.000000e+00 : f32
    %cst_1 = arith.constant 1.000000e+00 : f32
    %9 = vector.broadcast %cst : f32 to vector<8x128xf32>
    %10 = vector.broadcast %cst_1 : f32 to vector<8x128xf32>
    %11 = arith.select %8, %9, %10 : vector<8x128xi1>, vector<8x128xf32>
    %cst_2 = arith.constant -1.000000e+00 : f32
    %cst_3 = arith.constant 0.000000e+00 : f32
    %12 = vector.broadcast %cst_2 : f32 to vector<8x128xf32>
    %13 = vector.broadcast %cst_3 : f32 to vector<8x128xf32>
    %14 = arith.select %8, %12, %13 : vector<8x128xi1>, vector<8x128xf32>
    %c0 = arith.constant 0 : index
    %c0_4 = arith.constant 0 : index
    %c0_5 = arith.constant 0 : index
    %15 = vector.load %arg1[%c0, %c0_4, %c0_5] : memref<4x8x16xf32, #tpu.memory_space<vmem>>, vector<4x8x16xf32>
    %16 = vector.shape_cast %15 : vector<4x8x16xf32> to vector<32x16xf32>
    %c0_6 = arith.constant 0 : index
    %c0_7 = arith.constant 0 : index
    %17 = vector.load %arg4[%c0_6, %c0_7] : memref<16x128xf32, #tpu.memory_space<vmem>>, vector<16x128xf32>
    %cst_8 = arith.constant dense<0.000000e+00> : vector<32x128xf32>
    %18 = tpu.matmul %16, %17, %cst_8 {dimension_numbers = #tpu.dot_dimension_numbers<[1], [0], [0], [1], [0, 0, 1, 1], [], []>} : vector<32x16xf32>, vector<16x128xf32>, vector<32x128xf32> -> vector<32x128xf32>
    %c0_9 = arith.constant 0 : index
    %c0_10 = arith.constant 0 : index
    %19 = vector.load %arg6[%c0_9, %c0_10] : memref<1x128xf32, #tpu.memory_space<vmem>>, vector<1x128xf32>
    %20 = vector.broadcast %19 : vector<1x128xf32> to vector<32x128xf32>
    %21 = arith.addf %18, %20 : vector<32x128xf32>
    %22 = vector.shape_cast %21 : vector<32x128xf32> to vector<4x8x128xf32>
    %c0_11 = arith.constant 0 : index
    %c0_12 = arith.constant 0 : index
    %c0_13 = arith.constant 0 : index
    %23 = vector.load %arg15[%c0_11, %c0_12, %c0_13] : memref<4x8x128xf32, #tpu.memory_space<vmem>>, vector<4x8x128xf32>
    tpu.vector_store %arg15[%c0_11, %c0_12, %c0_13], %22 {strides = array<i32>} : memref<4x8x128xf32, #tpu.memory_space<vmem>>, vector<4x8x128xf32>,
    %c0_14 = arith.constant 0 : index
    %c0_15 = arith.constant 0 : index
    %24 = vector.load %arg5[%c0_14, %c0_15] : memref<128x128xf32, #tpu.memory_space<vmem>>, vector<128x128xf32>
    %c0_16 = arith.constant 0 : index
    %c0_17 = arith.constant 0 : index
    %c0_18 = arith.constant 0 : index
    %25 = vector.load %arg13[%c0_16, %c0_17, %c0_18] : memref<2x8x128xf32, #tpu.memory_space<vmem>>, vector<1x8x128xf32>
    %26 = vector.shape_cast %25 : vector<1x8x128xf32> to vector<8x128xf32>
    %c0_19 = arith.constant 0 : index
    %c0_20 = arith.constant 0 : index
    %c0_21 = arith.constant 0 : index
    %27 = vector.load %arg14[%c0_19, %c0_20, %c0_21] : memref<2x8x128xf32, #tpu.memory_space<vmem>>, vector<1x8x128xf32>
    %28 = vector.shape_cast %27 : vector<1x8x128xf32> to vector<8x128xf32>
    %c0_i32_22 = arith.constant 0 : i32
    %29 = arith.index_cast %c0_i32_22 : i32 to index
    %c0_23 = arith.constant 0 : index
    %c0_24 = arith.constant 0 : index
    %30 = vector.load %arg15[%29, %c0_23, %c0_24] : memref<4x8x128xf32, #tpu.memory_space<vmem>>, vector<1x8x128xf32>
    %31 = vector.shape_cast %30 : vector<1x8x128xf32> to vector<8x128xf32>
    %cst_25 = arith.constant dense<0.000000e+00> : vector<8x128xf32>
    %32 = tpu.matmul %26, %24, %cst_25 {dimension_numbers = #tpu.dot_dimension_numbers<[1], [0], [0], [1], [0, 0, 1, 1], [], []>} : vector<8x128xf32>, vector<128x128xf32>, vector<8x128xf32> -> vector<8x128xf32>
    %33 = arith.addf %31, %32 : vector<8x128xf32>
    %34 = arith.mulf %33, %11 : vector<8x128xf32>
    %35 = arith.negf %34 : vector<8x128xf32>
    %36 = math.exp %35 : vector<8x128xf32>
    %cst_26 = arith.constant 1.000000e+00 : f32
    %37 = vector.broadcast %cst_26 : f32 to vector<8x128xf32>
    %38 = arith.addf %37, %36 : vector<8x128xf32>
    %39 = arith.divf %37, %38 : vector<8x128xf32>
    %40 = arith.mulf %11, %39 : vector<8x128xf32>
    %41 = arith.addf %40, %14 : vector<8x128xf32>
    %c64_i32_27 = arith.constant 64 : i32
    %42 = tpu.dynamic_rotate %41 by %c64_i32_27 dim 1 : vector<8x128xf32>, i32 -> vector<8x128xf32>
    %43 = arith.mulf %41, %42 : vector<8x128xf32>
    %44 = arith.mulf %41, %28 : vector<8x128xf32>
    %c32_i32 = arith.constant 32 : i32
    %45 = tpu.dynamic_rotate %43 by %c32_i32 dim 1 : vector<8x128xf32>, i32 -> vector<8x128xf32>
    %46 = arith.addf %44, %45 : vector<8x128xf32>
    %47 = math.tanh %46 : vector<8x128xf32>
    %48 = arith.mulf %42, %47 : vector<8x128xf32>
    %49 = arith.index_cast %c0_i32_22 : i32 to index
    %c0_28 = arith.constant 0 : index
    %c0_29 = arith.constant 0 : index
    %50 = vector.load %arg16[%49, %c0_28, %c0_29] : memref<4x8x128xf32, #tpu.memory_space<vmem>>, vector<1x8x128xf32>
    %51 = vector.shape_cast %50 : vector<1x8x128xf32> to vector<8x128xf32>
    %52 = vector.shape_cast %48 : vector<8x128xf32> to vector<1x8x128xf32>
    tpu.vector_store %arg16[%49, %c0_28, %c0_29], %52 {strides = array<i32>} : memref<4x8x128xf32, #tpu.memory_space<vmem>>, vector<1x8x128xf32>,
    %c1_i32 = arith.constant 1 : i32
    %53 = arith.index_cast %c1_i32 : i32 to index
    %c0_30 = arith.constant 0 : index
    %c0_31 = arith.constant 0 : index
    %54 = vector.load %arg15[%53, %c0_30, %c0_31] : memref<4x8x128xf32, #tpu.memory_space<vmem>>, vector<1x8x128xf32>
    %55 = vector.shape_cast %54 : vector<1x8x128xf32> to vector<8x128xf32>
    %cst_32 = arith.constant dense<0.000000e+00> : vector<8x128xf32>
    %56 = tpu.matmul %48, %24, %cst_32 {dimension_numbers = #tpu.dot_dimension_numbers<[1], [0], [0], [1], [0, 0, 1, 1], [], []>} : vector<8x128xf32>, vector<128x128xf32>, vector<8x128xf32> -> vector<8x128xf32>
    %57 = arith.addf %55, %56 : vector<8x128xf32>
    %58 = arith.mulf %57, %11 : vector<8x128xf32>
    %59 = arith.negf %58 : vector<8x128xf32>
    %60 = math.exp %59 : vector<8x128xf32>
    %cst_33 = arith.constant 1.000000e+00 : f32
    %61 = vector.broadcast %cst_33 : f32 to vector<8x128xf32>
    %62 = arith.addf %61, %60 : vector<8x128xf32>
    %63 = arith.divf %61, %62 : vector<8x128xf32>
    %64 = arith.mulf %11, %63 : vector<8x128xf32>
    %65 = arith.addf %64, %14 : vector<8x128xf32>
    %c64_i32_34 = arith.constant 64 : i32
    %66 = tpu.dynamic_rotate %65 by %c64_i32_34 dim 1 : vector<8x128xf32>, i32 -> vector<8x128xf32>
    %67 = arith.mulf %65, %66 : vector<8x128xf32>
    %68 = arith.mulf %65, %46 : vector<8x128xf32>
    %c32_i32_35 = arith.constant 32 : i32
    %69 = tpu.dynamic_rotate %67 by %c32_i32_35 dim 1 : vector<8x128xf32>, i32 -> vector<8x128xf32>
    %70 = arith.addf %68, %69 : vector<8x128xf32>
    %71 = math.tanh %70 : vector<8x128xf32>
    %72 = arith.mulf %66, %71 : vector<8x128xf32>
    %73 = arith.index_cast %c1_i32 : i32 to index
    %c0_36 = arith.constant 0 : index
    %c0_37 = arith.constant 0 : index
    %74 = vector.load %arg16[%73, %c0_36, %c0_37] : memref<4x8x128xf32, #tpu.memory_space<vmem>>, vector<1x8x128xf32>
    %75 = vector.shape_cast %74 : vector<1x8x128xf32> to vector<8x128xf32>
    %76 = vector.shape_cast %72 : vector<8x128xf32> to vector<1x8x128xf32>
    tpu.vector_store %arg16[%73, %c0_36, %c0_37], %76 {strides = array<i32>} : memref<4x8x128xf32, #tpu.memory_space<vmem>>, vector<1x8x128xf32>,
    %c2_i32 = arith.constant 2 : i32
    %77 = arith.index_cast %c2_i32 : i32 to index
    %c0_38 = arith.constant 0 : index
    %c0_39 = arith.constant 0 : index
    %78 = vector.load %arg15[%77, %c0_38, %c0_39] : memref<4x8x128xf32, #tpu.memory_space<vmem>>, vector<1x8x128xf32>
    %79 = vector.shape_cast %78 : vector<1x8x128xf32> to vector<8x128xf32>
    %cst_40 = arith.constant dense<0.000000e+00> : vector<8x128xf32>
    %80 = tpu.matmul %72, %24, %cst_40 {dimension_numbers = #tpu.dot_dimension_numbers<[1], [0], [0], [1], [0, 0, 1, 1], [], []>} : vector<8x128xf32>, vector<128x128xf32>, vector<8x128xf32> -> vector<8x128xf32>
    %81 = arith.addf %79, %80 : vector<8x128xf32>
    %82 = arith.mulf %81, %11 : vector<8x128xf32>
    %83 = arith.negf %82 : vector<8x128xf32>
    %84 = math.exp %83 : vector<8x128xf32>
    %cst_41 = arith.constant 1.000000e+00 : f32
    %85 = vector.broadcast %cst_41 : f32 to vector<8x128xf32>
    %86 = arith.addf %85, %84 : vector<8x128xf32>
    %87 = arith.divf %85, %86 : vector<8x128xf32>
    %88 = arith.mulf %11, %87 : vector<8x128xf32>
    %89 = arith.addf %88, %14 : vector<8x128xf32>
    %c64_i32_42 = arith.constant 64 : i32
    %90 = tpu.dynamic_rotate %89 by %c64_i32_42 dim 1 : vector<8x128xf32>, i32 -> vector<8x128xf32>
    %91 = arith.mulf %89, %90 : vector<8x128xf32>
    %92 = arith.mulf %89, %70 : vector<8x128xf32>
    %c32_i32_43 = arith.constant 32 : i32
    %93 = tpu.dynamic_rotate %91 by %c32_i32_43 dim 1 : vector<8x128xf32>, i32 -> vector<8x128xf32>
    %94 = arith.addf %92, %93 : vector<8x128xf32>
    %95 = math.tanh %94 : vector<8x128xf32>
    %96 = arith.mulf %90, %95 : vector<8x128xf32>
    %97 = arith.index_cast %c2_i32 : i32 to index
    %c0_44 = arith.constant 0 : index
    %c0_45 = arith.constant 0 : index
    %98 = vector.load %arg16[%97, %c0_44, %c0_45] : memref<4x8x128xf32, #tpu.memory_space<vmem>>, vector<1x8x128xf32>
    %99 = vector.shape_cast %98 : vector<1x8x128xf32> to vector<8x128xf32>
    %100 = vector.shape_cast %96 : vector<8x128xf32> to vector<1x8x128xf32>
    tpu.vector_store %arg16[%97, %c0_44, %c0_45], %100 {strides = array<i32>} : memref<4x8x128xf32, #tpu.memory_space<vmem>>, vector<1x8x128xf32>,
    %c3_i32 = arith.constant 3 : i32
    %101 = arith.index_cast %c3_i32 : i32 to index
    %c0_46 = arith.constant 0 : index
    %c0_47 = arith.constant 0 : index
    %102 = vector.load %arg15[%101, %c0_46, %c0_47] : memref<4x8x128xf32, #tpu.memory_space<vmem>>, vector<1x8x128xf32>
    %103 = vector.shape_cast %102 : vector<1x8x128xf32> to vector<8x128xf32>
    %cst_48 = arith.constant dense<0.000000e+00> : vector<8x128xf32>
    %104 = tpu.matmul %96, %24, %cst_48 {dimension_numbers = #tpu.dot_dimension_numbers<[1], [0], [0], [1], [0, 0, 1, 1], [], []>} : vector<8x128xf32>, vector<128x128xf32>, vector<8x128xf32> -> vector<8x128xf32>
    %105 = arith.addf %103, %104 : vector<8x128xf32>
    %106 = arith.mulf %105, %11 : vector<8x128xf32>
    %107 = arith.negf %106 : vector<8x128xf32>
    %108 = math.exp %107 : vector<8x128xf32>
    %cst_49 = arith.constant 1.000000e+00 : f32
    %109 = vector.broadcast %cst_49 : f32 to vector<8x128xf32>
    %110 = arith.addf %109, %108 : vector<8x128xf32>
    %111 = arith.divf %109, %110 : vector<8x128xf32>
    %112 = arith.mulf %11, %111 : vector<8x128xf32>
    %113 = arith.addf %112, %14 : vector<8x128xf32>
    %c64_i32_50 = arith.constant 64 : i32
    %114 = tpu.dynamic_rotate %113 by %c64_i32_50 dim 1 : vector<8x128xf32>, i32 -> vector<8x128xf32>
    %115 = arith.mulf %113, %114 : vector<8x128xf32>
    %116 = arith.mulf %113, %94 : vector<8x128xf32>
    %c32_i32_51 = arith.constant 32 : i32
    %117 = tpu.dynamic_rotate %115 by %c32_i32_51 dim 1 : vector<8x128xf32>, i32 -> vector<8x128xf32>
    %118 = arith.addf %116, %117 : vector<8x128xf32>
    %119 = math.tanh %118 : vector<8x128xf32>
    %120 = arith.mulf %114, %119 : vector<8x128xf32>
    %121 = arith.index_cast %c3_i32 : i32 to index
    %c0_52 = arith.constant 0 : index
    %c0_53 = arith.constant 0 : index
    %122 = vector.load %arg16[%121, %c0_52, %c0_53] : memref<4x8x128xf32, #tpu.memory_space<vmem>>, vector<1x8x128xf32>
    %123 = vector.shape_cast %122 : vector<1x8x128xf32> to vector<8x128xf32>
    %124 = vector.shape_cast %120 : vector<8x128xf32> to vector<1x8x128xf32>
    tpu.vector_store %arg16[%121, %c0_52, %c0_53], %124 {strides = array<i32>} : memref<4x8x128xf32, #tpu.memory_space<vmem>>, vector<1x8x128xf32>,
    %c4_i32 = arith.constant 4 : i32
    %c0_54 = arith.constant 0 : index
    %c0_55 = arith.constant 0 : index
    %c0_56 = arith.constant 0 : index
    %125 = vector.load %arg13[%c0_54, %c0_55, %c0_56] : memref<2x8x128xf32, #tpu.memory_space<vmem>>, vector<1x8x128xf32>
    %126 = vector.shape_cast %125 : vector<1x8x128xf32> to vector<8x128xf32>
    %127 = vector.shape_cast %120 : vector<8x128xf32> to vector<1x8x128xf32>
    tpu.vector_store %arg13[%c0_54, %c0_55, %c0_56], %127 {strides = array<i32>} : memref<2x8x128xf32, #tpu.memory_space<vmem>>, vector<1x8x128xf32>,
    %c0_57 = arith.constant 0 : index
    %c0_58 = arith.constant 0 : index
    %c0_59 = arith.constant 0 : index
    %128 = vector.load %arg14[%c0_57, %c0_58, %c0_59] : memref<2x8x128xf32, #tpu.memory_space<vmem>>, vector<1x8x128xf32>
    %129 = vector.shape_cast %128 : vector<1x8x128xf32> to vector<8x128xf32>
    %130 = vector.shape_cast %118 : vector<8x128xf32> to vector<1x8x128xf32>
    tpu.vector_store %arg14[%c0_57, %c0_58, %c0_59], %130 {strides = array<i32>} : memref<2x8x128xf32, #tpu.memory_space<vmem>>, vector<1x8x128xf32>,
    %c0_60 = arith.constant 0 : index
    %c0_61 = arith.constant 0 : index
    %c0_62 = arith.constant 0 : index
    %131 = vector.load %arg16[%c0_60, %c0_61, %c0_62] : memref<4x8x128xf32, #tpu.memory_space<vmem>>, vector<4x8x128xf32>
    %132 = vector.shape_cast %131 : vector<4x8x128xf32> to vector<32x128xf32>
    %c0_63 = arith.constant 0 : index
    %c0_64 = arith.constant 0 : index
    %133 = vector.load %arg7[%c0_63, %c0_64] : memref<128x128xf32, #tpu.memory_space<vmem>>, vector<128x128xf32>
    %cst_65 = arith.constant dense<0.000000e+00> : vector<32x128xf32>
    %134 = tpu.matmul %132, %133, %cst_65 {dimension_numbers = #tpu.dot_dimension_numbers<[1], [0], [0], [1], [0, 0, 1, 1], [], []>} : vector<32x128xf32>, vector<128x128xf32>, vector<32x128xf32> -> vector<32x128xf32>
    %c0_66 = arith.constant 0 : index
    %c0_67 = arith.constant 0 : index
    %135 = vector.load %arg9[%c0_66, %c0_67] : memref<1x128xf32, #tpu.memory_space<vmem>>, vector<1x128xf32>
    %136 = vector.broadcast %135 : vector<1x128xf32> to vector<32x128xf32>
    %137 = arith.addf %134, %136 : vector<32x128xf32>
    %138 = vector.shape_cast %137 : vector<32x128xf32> to vector<4x8x128xf32>
    %c0_68 = arith.constant 0 : index
    %c0_69 = arith.constant 0 : index
    %c0_70 = arith.constant 0 : index
    %139 = vector.load %arg15[%c0_68, %c0_69, %c0_70] : memref<4x8x128xf32, #tpu.memory_space<vmem>>, vector<4x8x128xf32>
    tpu.vector_store %arg15[%c0_68, %c0_69, %c0_70], %138 {strides = array<i32>} : memref<4x8x128xf32, #tpu.memory_space<vmem>>, vector<4x8x128xf32>,
    %c0_71 = arith.constant 0 : index
    %c0_72 = arith.constant 0 : index
    %140 = vector.load %arg8[%c0_71, %c0_72] : memref<128x128xf32, #tpu.memory_space<vmem>>, vector<128x128xf32>
    %c1 = arith.constant 1 : index
    %c0_73 = arith.constant 0 : index
    %c0_74 = arith.constant 0 : index
    %141 = vector.load %arg13[%c1, %c0_73, %c0_74] : memref<2x8x128xf32, #tpu.memory_space<vmem>>, vector<1x8x128xf32>
    %142 = vector.shape_cast %141 : vector<1x8x128xf32> to vector<8x128xf32>
    %c1_75 = arith.constant 1 : index
    %c0_76 = arith.constant 0 : index
    %c0_77 = arith.constant 0 : index
    %143 = vector.load %arg14[%c1_75, %c0_76, %c0_77] : memref<2x8x128xf32, #tpu.memory_space<vmem>>, vector<1x8x128xf32>
    %144 = vector.shape_cast %143 : vector<1x8x128xf32> to vector<8x128xf32>
    %c0_i32_78 = arith.constant 0 : i32
    %145 = arith.index_cast %c0_i32_78 : i32 to index
    %c0_79 = arith.constant 0 : index
    %c0_80 = arith.constant 0 : index
    %146 = vector.load %arg15[%145, %c0_79, %c0_80] : memref<4x8x128xf32, #tpu.memory_space<vmem>>, vector<1x8x128xf32>
    %147 = vector.shape_cast %146 : vector<1x8x128xf32> to vector<8x128xf32>
    %cst_81 = arith.constant dense<0.000000e+00> : vector<8x128xf32>
    %148 = tpu.matmul %142, %140, %cst_81 {dimension_numbers = #tpu.dot_dimension_numbers<[1], [0], [0], [1], [0, 0, 1, 1], [], []>} : vector<8x128xf32>, vector<128x128xf32>, vector<8x128xf32> -> vector<8x128xf32>
    %149 = arith.addf %147, %148 : vector<8x128xf32>
    %150 = arith.mulf %149, %11 : vector<8x128xf32>
    %151 = arith.negf %150 : vector<8x128xf32>
    %152 = math.exp %151 : vector<8x128xf32>
    %cst_82 = arith.constant 1.000000e+00 : f32
    %153 = vector.broadcast %cst_82 : f32 to vector<8x128xf32>
    %154 = arith.addf %153, %152 : vector<8x128xf32>
    %155 = arith.divf %153, %154 : vector<8x128xf32>
    %156 = arith.mulf %11, %155 : vector<8x128xf32>
    %157 = arith.addf %156, %14 : vector<8x128xf32>
    %c64_i32_83 = arith.constant 64 : i32
    %158 = tpu.dynamic_rotate %157 by %c64_i32_83 dim 1 : vector<8x128xf32>, i32 -> vector<8x128xf32>
    %159 = arith.mulf %157, %158 : vector<8x128xf32>
    %160 = arith.mulf %157, %144 : vector<8x128xf32>
    %c32_i32_84 = arith.constant 32 : i32
    %161 = tpu.dynamic_rotate %159 by %c32_i32_84 dim 1 : vector<8x128xf32>, i32 -> vector<8x128xf32>
    %162 = arith.addf %160, %161 : vector<8x128xf32>
    %163 = math.tanh %162 : vector<8x128xf32>
    %164 = arith.mulf %158, %163 : vector<8x128xf32>
    %165 = arith.index_cast %c0_i32_78 : i32 to index
    %c0_85 = arith.constant 0 : index
    %c0_86 = arith.constant 0 : index
    %166 = vector.load %arg16[%165, %c0_85, %c0_86] : memref<4x8x128xf32, #tpu.memory_space<vmem>>, vector<1x8x128xf32>
    %167 = vector.shape_cast %166 : vector<1x8x128xf32> to vector<8x128xf32>
    %168 = vector.shape_cast %164 : vector<8x128xf32> to vector<1x8x128xf32>
    tpu.vector_store %arg16[%165, %c0_85, %c0_86], %168 {strides = array<i32>} : memref<4x8x128xf32, #tpu.memory_space<vmem>>, vector<1x8x128xf32>,
    %c1_i32_87 = arith.constant 1 : i32
    %169 = arith.index_cast %c1_i32_87 : i32 to index
    %c0_88 = arith.constant 0 : index
    %c0_89 = arith.constant 0 : index
    %170 = vector.load %arg15[%169, %c0_88, %c0_89] : memref<4x8x128xf32, #tpu.memory_space<vmem>>, vector<1x8x128xf32>
    %171 = vector.shape_cast %170 : vector<1x8x128xf32> to vector<8x128xf32>
    %cst_90 = arith.constant dense<0.000000e+00> : vector<8x128xf32>
    %172 = tpu.matmul %164, %140, %cst_90 {dimension_numbers = #tpu.dot_dimension_numbers<[1], [0], [0], [1], [0, 0, 1, 1], [], []>} : vector<8x128xf32>, vector<128x128xf32>, vector<8x128xf32> -> vector<8x128xf32>
    %173 = arith.addf %171, %172 : vector<8x128xf32>
    %174 = arith.mulf %173, %11 : vector<8x128xf32>
    %175 = arith.negf %174 : vector<8x128xf32>
    %176 = math.exp %175 : vector<8x128xf32>
    %cst_91 = arith.constant 1.000000e+00 : f32
    %177 = vector.broadcast %cst_91 : f32 to vector<8x128xf32>
    %178 = arith.addf %177, %176 : vector<8x128xf32>
    %179 = arith.divf %177, %178 : vector<8x128xf32>
    %180 = arith.mulf %11, %179 : vector<8x128xf32>
    %181 = arith.addf %180, %14 : vector<8x128xf32>
    %c64_i32_92 = arith.constant 64 : i32
    %182 = tpu.dynamic_rotate %181 by %c64_i32_92 dim 1 : vector<8x128xf32>, i32 -> vector<8x128xf32>
    %183 = arith.mulf %181, %182 : vector<8x128xf32>
    %184 = arith.mulf %181, %162 : vector<8x128xf32>
    %c32_i32_93 = arith.constant 32 : i32
    %185 = tpu.dynamic_rotate %183 by %c32_i32_93 dim 1 : vector<8x128xf32>, i32 -> vector<8x128xf32>
    %186 = arith.addf %184, %185 : vector<8x128xf32>
    %187 = math.tanh %186 : vector<8x128xf32>
    %188 = arith.mulf %182, %187 : vector<8x128xf32>
    %189 = arith.index_cast %c1_i32_87 : i32 to index
    %c0_94 = arith.constant 0 : index
    %c0_95 = arith.constant 0 : index
    %190 = vector.load %arg16[%189, %c0_94, %c0_95] : memref<4x8x128xf32, #tpu.memory_space<vmem>>, vector<1x8x128xf32>
    %191 = vector.shape_cast %190 : vector<1x8x128xf32> to vector<8x128xf32>
    %192 = vector.shape_cast %188 : vector<8x128xf32> to vector<1x8x128xf32>
    tpu.vector_store %arg16[%189, %c0_94, %c0_95], %192 {strides = array<i32>} : memref<4x8x128xf32, #tpu.memory_space<vmem>>, vector<1x8x128xf32>,
    %c2_i32_96 = arith.constant 2 : i32
    %193 = arith.index_cast %c2_i32_96 : i32 to index
    %c0_97 = arith.constant 0 : index
    %c0_98 = arith.constant 0 : index
    %194 = vector.load %arg15[%193, %c0_97, %c0_98] : memref<4x8x128xf32, #tpu.memory_space<vmem>>, vector<1x8x128xf32>
    %195 = vector.shape_cast %194 : vector<1x8x128xf32> to vector<8x128xf32>
    %cst_99 = arith.constant dense<0.000000e+00> : vector<8x128xf32>
    %196 = tpu.matmul %188, %140, %cst_99 {dimension_numbers = #tpu.dot_dimension_numbers<[1], [0], [0], [1], [0, 0, 1, 1], [], []>} : vector<8x128xf32>, vector<128x128xf32>, vector<8x128xf32> -> vector<8x128xf32>
    %197 = arith.addf %195, %196 : vector<8x128xf32>
    %198 = arith.mulf %197, %11 : vector<8x128xf32>
    %199 = arith.negf %198 : vector<8x128xf32>
    %200 = math.exp %199 : vector<8x128xf32>
    %cst_100 = arith.constant 1.000000e+00 : f32
    %201 = vector.broadcast %cst_100 : f32 to vector<8x128xf32>
    %202 = arith.addf %201, %200 : vector<8x128xf32>
    %203 = arith.divf %201, %202 : vector<8x128xf32>
    %204 = arith.mulf %11, %203 : vector<8x128xf32>
    %205 = arith.addf %204, %14 : vector<8x128xf32>
    %c64_i32_101 = arith.constant 64 : i32
    %206 = tpu.dynamic_rotate %205 by %c64_i32_101 dim 1 : vector<8x128xf32>, i32 -> vector<8x128xf32>
    %207 = arith.mulf %205, %206 : vector<8x128xf32>
    %208 = arith.mulf %205, %186 : vector<8x128xf32>
    %c32_i32_102 = arith.constant 32 : i32
    %209 = tpu.dynamic_rotate %207 by %c32_i32_102 dim 1 : vector<8x128xf32>, i32 -> vector<8x128xf32>
    %210 = arith.addf %208, %209 : vector<8x128xf32>
    %211 = math.tanh %210 : vector<8x128xf32>
    %212 = arith.mulf %206, %211 : vector<8x128xf32>
    %213 = arith.index_cast %c2_i32_96 : i32 to index
    %c0_103 = arith.constant 0 : index
    %c0_104 = arith.constant 0 : index
    %214 = vector.load %arg16[%213, %c0_103, %c0_104] : memref<4x8x128xf32, #tpu.memory_space<vmem>>, vector<1x8x128xf32>
    %215 = vector.shape_cast %214 : vector<1x8x128xf32> to vector<8x128xf32>
    %216 = vector.shape_cast %212 : vector<8x128xf32> to vector<1x8x128xf32>
    tpu.vector_store %arg16[%213, %c0_103, %c0_104], %216 {strides = array<i32>} : memref<4x8x128xf32, #tpu.memory_space<vmem>>, vector<1x8x128xf32>,
    %c3_i32_105 = arith.constant 3 : i32
    %217 = arith.index_cast %c3_i32_105 : i32 to index
    %c0_106 = arith.constant 0 : index
    %c0_107 = arith.constant 0 : index
    %218 = vector.load %arg15[%217, %c0_106, %c0_107] : memref<4x8x128xf32, #tpu.memory_space<vmem>>, vector<1x8x128xf32>
    %219 = vector.shape_cast %218 : vector<1x8x128xf32> to vector<8x128xf32>
    %cst_108 = arith.constant dense<0.000000e+00> : vector<8x128xf32>
    %220 = tpu.matmul %212, %140, %cst_108 {dimension_numbers = #tpu.dot_dimension_numbers<[1], [0], [0], [1], [0, 0, 1, 1], [], []>} : vector<8x128xf32>, vector<128x128xf32>, vector<8x128xf32> -> vector<8x128xf32>
    %221 = arith.addf %219, %220 : vector<8x128xf32>
    %222 = arith.mulf %221, %11 : vector<8x128xf32>
    %223 = arith.negf %222 : vector<8x128xf32>
    %224 = math.exp %223 : vector<8x128xf32>
    %cst_109 = arith.constant 1.000000e+00 : f32
    %225 = vector.broadcast %cst_109 : f32 to vector<8x128xf32>
    %226 = arith.addf %225, %224 : vector<8x128xf32>
    %227 = arith.divf %225, %226 : vector<8x128xf32>
    %228 = arith.mulf %11, %227 : vector<8x128xf32>
    %229 = arith.addf %228, %14 : vector<8x128xf32>
    %c64_i32_110 = arith.constant 64 : i32
    %230 = tpu.dynamic_rotate %229 by %c64_i32_110 dim 1 : vector<8x128xf32>, i32 -> vector<8x128xf32>
    %231 = arith.mulf %229, %230 : vector<8x128xf32>
    %232 = arith.mulf %229, %210 : vector<8x128xf32>
    %c32_i32_111 = arith.constant 32 : i32
    %233 = tpu.dynamic_rotate %231 by %c32_i32_111 dim 1 : vector<8x128xf32>, i32 -> vector<8x128xf32>
    %234 = arith.addf %232, %233 : vector<8x128xf32>
    %235 = math.tanh %234 : vector<8x128xf32>
    %236 = arith.mulf %230, %235 : vector<8x128xf32>
    %237 = arith.index_cast %c3_i32_105 : i32 to index
    %c0_112 = arith.constant 0 : index
    %c0_113 = arith.constant 0 : index
    %238 = vector.load %arg16[%237, %c0_112, %c0_113] : memref<4x8x128xf32, #tpu.memory_space<vmem>>, vector<1x8x128xf32>
    %239 = vector.shape_cast %238 : vector<1x8x128xf32> to vector<8x128xf32>
    %240 = vector.shape_cast %236 : vector<8x128xf32> to vector<1x8x128xf32>
    tpu.vector_store %arg16[%237, %c0_112, %c0_113], %240 {strides = array<i32>} : memref<4x8x128xf32, #tpu.memory_space<vmem>>, vector<1x8x128xf32>,
    %c4_i32_114 = arith.constant 4 : i32
    %c1_115 = arith.constant 1 : index
    %c0_116 = arith.constant 0 : index
    %c0_117 = arith.constant 0 : index
    %241 = vector.load %arg13[%c1_115, %c0_116, %c0_117] : memref<2x8x128xf32, #tpu.memory_space<vmem>>, vector<1x8x128xf32>
    %242 = vector.shape_cast %241 : vector<1x8x128xf32> to vector<8x128xf32>
    %243 = vector.shape_cast %236 : vector<8x128xf32> to vector<1x8x128xf32>
    tpu.vector_store %arg13[%c1_115, %c0_116, %c0_117], %243 {strides = array<i32>} : memref<2x8x128xf32, #tpu.memory_space<vmem>>, vector<1x8x128xf32>,
    %c1_118 = arith.constant 1 : index
    %c0_119 = arith.constant 0 : index
    %c0_120 = arith.constant 0 : index
    %244 = vector.load %arg14[%c1_118, %c0_119, %c0_120] : memref<2x8x128xf32, #tpu.memory_space<vmem>>, vector<1x8x128xf32>
    %245 = vector.shape_cast %244 : vector<1x8x128xf32> to vector<8x128xf32>
    %246 = vector.shape_cast %234 : vector<8x128xf32> to vector<1x8x128xf32>
    tpu.vector_store %arg14[%c1_118, %c0_119, %c0_120], %246 {strides = array<i32>} : memref<2x8x128xf32, #tpu.memory_space<vmem>>, vector<1x8x128xf32>,
    %c0_121 = arith.constant 0 : index
    %c0_122 = arith.constant 0 : index
    %c0_123 = arith.constant 0 : index
    %247 = vector.load %arg16[%c0_121, %c0_122, %c0_123] : memref<4x8x128xf32, #tpu.memory_space<vmem>>, vector<4x8x128xf32>
    %248 = vector.shape_cast %247 : vector<4x8x128xf32> to vector<32x128xf32>
    %c0_124 = arith.constant 0 : index
    %c0_125 = arith.constant 0 : index
    %249 = vector.load %arg10[%c0_124, %c0_125] : memref<128x128xf32, #tpu.memory_space<vmem>>, vector<128x128xf32>
    %cst_126 = arith.constant dense<0.000000e+00> : vector<32x128xf32>
    %250 = tpu.matmul %248, %249, %cst_126 {dimension_numbers = #tpu.dot_dimension_numbers<[1], [0], [0], [1], [0, 0, 1, 1], [], []>} : vector<32x128xf32>, vector<128x128xf32>, vector<32x128xf32> -> vector<32x128xf32>
    %c0_127 = arith.constant 0 : index
    %c0_128 = arith.constant 0 : index
    %251 = vector.load %arg11[%c0_127, %c0_128] : memref<1x128xf32, #tpu.memory_space<vmem>>, vector<1x128xf32>
    %252 = vector.broadcast %251 : vector<1x128xf32> to vector<32x128xf32>
    %253 = arith.addf %250, %252 : vector<32x128xf32>
    %254 = vector.shape_cast %253 : vector<32x128xf32> to vector<4x8x128xf32>
    %c0_129 = arith.constant 0 : index
    %c0_130 = arith.constant 0 : index
    %c0_131 = arith.constant 0 : index
    %255 = vector.load %arg12[%c0_129, %c0_130, %c0_131] : memref<4x8x128xf32, #tpu.memory_space<vmem>>, vector<4x8x128xf32>
    tpu.vector_store %arg12[%c0_129, %c0_130, %c0_131], %254 {strides = array<i32>} : memref<4x8x128xf32, #tpu.memory_space<vmem>>, vector<4x8x128xf32>,
    return
  }
  func.func @transform_0(%arg0: i32) -> (i32, i32, i32) {
    %c0_i32 = arith.constant 0 : i32
    %c0_i32_0 = arith.constant 0 : i32
    %c0_i32_1 = arith.constant 0 : i32
    return %arg0, %c0_i32, %c0_i32_0 : i32, i32, i32
  }
  func.func @transform_1(%arg0: i32) -> (i32, i32, i32) {
    %c0_i32 = arith.constant 0 : i32
    %c0_i32_0 = arith.constant 0 : i32
    %c0_i32_1 = arith.constant 0 : i32
    %c0_i32_2 = arith.constant 0 : i32
    return %c0_i32, %c0_i32_0, %c0_i32_1 : i32, i32, i32
  }
  func.func @transform_2(%arg0: i32) -> (i32, i32, i32) {
    %c0_i32 = arith.constant 0 : i32
    %c0_i32_0 = arith.constant 0 : i32
    %c0_i32_1 = arith.constant 0 : i32
    %c0_i32_2 = arith.constant 0 : i32
    return %c0_i32, %c0_i32_0, %c0_i32_1 : i32, i32, i32
  }
  func.func @transform_3(%arg0: i32) -> (i32, i32) {
    %c0_i32 = arith.constant 0 : i32
    %c0_i32_0 = arith.constant 0 : i32
    %c0_i32_1 = arith.constant 0 : i32
    return %c0_i32, %c0_i32_0 : i32, i32
  }
  func.func @transform_4(%arg0: i32) -> (i32, i32) {
    %c0_i32 = arith.constant 0 : i32
    %c0_i32_0 = arith.constant 0 : i32
    %c0_i32_1 = arith.constant 0 : i32
    return %c0_i32, %c0_i32_0 : i32, i32
  }
  func.func @transform_5(%arg0: i32) -> (i32, i32) {
    %c0_i32 = arith.constant 0 : i32
    %c0_i32_0 = arith.constant 0 : i32
    %c0_i32_1 = arith.constant 0 : i32
    return %c0_i32, %c0_i32_0 : i32, i32
  }
  func.func @transform_6(%arg0: i32) -> (i32, i32) {
    %c0_i32 = arith.constant 0 : i32
    %c0_i32_0 = arith.constant 0 : i32
    %c0_i32_1 = arith.constant 0 : i32
    return %c0_i32, %c0_i32_0 : i32, i32
  }
  func.func @transform_7(%arg0: i32) -> (i32, i32) {
    %c0_i32 = arith.constant 0 : i32
    %c0_i32_0 = arith.constant 0 : i32
    %c0_i32_1 = arith.constant 0 : i32
    return %c0_i32, %c0_i32_0 : i32, i32
  }
  func.func @transform_8(%arg0: i32) -> (i32, i32) {
    %c0_i32 = arith.constant 0 : i32
    %c0_i32_0 = arith.constant 0 : i32
    %c0_i32_1 = arith.constant 0 : i32
    return %c0_i32, %c0_i32_0 : i32, i32
  }
  func.func @transform_9(%arg0: i32) -> (i32, i32) {
    %c0_i32 = arith.constant 0 : i32
    %c0_i32_0 = arith.constant 0 : i32
    %c0_i32_1 = arith.constant 0 : i32
    return %c0_i32, %c0_i32_0 : i32, i32
  }
  func.func @transform_10(%arg0: i32) -> (i32, i32) {
    %c0_i32 = arith.constant 0 : i32
    %c0_i32_0 = arith.constant 0 : i32
    %c0_i32_1 = arith.constant 0 : i32
    return %c0_i32, %c0_i32_0 : i32, i32
  }
  func.func @transform_11(%arg0: i32) -> (i32, i32, i32) {
    %c0_i32 = arith.constant 0 : i32
    %c0_i32_0 = arith.constant 0 : i32
    %c0_i32_1 = arith.constant 0 : i32
    return %arg0, %c0_i32, %c0_i32_0 : i32, i32, i32
  }
}

</mosaic_0001>

<llo_original>
// kernel: lstm_forward.1
$region0: #{lstm_forward.1}
  #allocation0 [shape = 'u32[]', space=smem, size = 0x4, offset = 0x4, fixed_abs, tag = 'smem constant byte address 0x4 - core index']
  #allocation1 [shape = 'u32[144,128]{1,0:T(1,128)}', space=vmem, size = 0x12000, scoped, tag = 'internal scratch']
  #allocation2 [shape = 'f32[2,8,128]{2,1,0:T(8,128)}', space=vmem, size = 0x2000, scoped, tag = 'scratch operand']
  #allocation3 [shape = 'f32[2,8,128]{2,1,0:T(8,128)}', space=vmem, size = 0x2000, scoped, tag = 'scratch operand']
  #allocation4 [shape = 'f32[4,8,128]{2,1,0:T(8,128)}', space=vmem, size = 0x4000, scoped, tag = 'scratch operand']
  #allocation5 [shape = 'f32[4,8,128]{2,1,0:T(8,128)}', space=vmem, size = 0x4000, scoped, tag = 'scratch operand']
  %s0 = inlined_call_operand.vmem [shape: f32[8,8,16], index: 0, kind: input, shape index: {}]
  %s1 = inlined_call_operand.vmem [shape: f32[2,8,128], index: 1, kind: input, shape index: {}, may-alias: {1,2}]
  %s2 = inlined_call_operand.vmem [shape: f32[2,8,128], index: 2, kind: input, shape index: {}, may-alias: {1,2}]
  %s3 = inlined_call_operand.vmem [shape: f32[16,128], index: 3, kind: input, shape index: {}]
  %s4 = inlined_call_operand.vmem [shape: f32[128,128], index: 4, kind: input, shape index: {}]
  %s5 = inlined_call_operand.vmem [shape: f32[1,128], index: 5, kind: input, shape index: {}]
  %s6 = inlined_call_operand.vmem [shape: f32[128,128], index: 6, kind: input, shape index: {}]
  %s7 = inlined_call_operand.vmem [shape: f32[128,128], index: 7, kind: input, shape index: {}]
  %s8 = inlined_call_operand.vmem [shape: f32[1,128], index: 8, kind: input, shape index: {}]
  %s9 = inlined_call_operand.vmem [shape: f32[128,128], index: 9, kind: input, shape index: {}]
  %s10 = inlined_call_operand.vmem [shape: f32[1,128], index: 10, kind: input, shape index: {}]
  %s11 = inlined_call_operand.vmem [shape: f32[8,8,128], index: 11, kind: output, shape index: {}]
  %s12 = sld [smem:[#allocation0]]
  $region81: #{lstm_forward.1} parent=0
    _
  %s14 = ssub.s32 1, %s12
  %s15 = scalar_select 0, %s14, %s12
  loop: start=0, step=1, limit=4
  $region2: #{lstm_forward.1} parent=0 // loop_pre_header
    _
  $region3: #{lstm_forward.1} parent=0 // loop_header
    %s17 = sphi 0, %s21
    %p18 = scmp.ge.s32.totalorder %s17, 4
    %s27 = sphi 0, %s29
    %s30 = sphi 0, %s27
    %s31 = sphi 0, %s30
    %s47 = sphi 0, %s31
    %s51 = sphi 0, %s51
    %s53 = sphi 0, %s51
    %s54 = sphi 0, %s53
    %s68 = sphi 0, %s54
    %s72 = sphi 0, %s72
    %s74 = sphi 0, %s72
    %s75 = sphi 0, %s74
    %s89 = sphi 0, %s75
    %s93 = sphi 0, %s93
    %s95 = sphi 0, %s93
    %s96 = sphi 0, %s95
    %s110 = sphi 0, %s96
    %s114 = sphi 0, %s114
    %s116 = sphi 0, %s114
    %s117 = sphi 0, %s116
    %s131 = sphi 0, %s117
    %s135 = sphi 0, %s135
    %s137 = sphi 0, %s135
    %s138 = sphi 0, %s137
    %s152 = sphi 0, %s138
    %s156 = sphi 0, %s156
    %s158 = sphi 0, %s156
    %s159 = sphi 0, %s158
    %s173 = sphi 0, %s159
    %s177 = sphi 0, %s177
    %s179 = sphi 0, %s177
    %s180 = sphi 0, %s179
    %s194 = sphi 0, %s180
    %s198 = sphi 0, %s198
    %s200 = sphi 0, %s198
    %s201 = sphi 0, %s200
    %s215 = sphi 0, %s201
    %s219 = sphi 0, %s219
    %s221 = sphi 0, %s219
    %s222 = sphi 0, %s221
    %s236 = sphi 0, %s222
    %s240 = sphi 0, %s240
    %s242 = sphi 0, %s240
    %s243 = sphi 0, %s242
    %s257 = sphi 0, %s243
    %s263 = sphi 0, %s265
    %s266 = sphi 0, %s263
    %s267 = sphi 0, %s266
    %s283 = sphi 0, %s267
  $region4: #{lstm_forward.1} parent=0 // loop_header_branch
    %20 = sbr.rel (%p18) target = $region8
  $region5: #{lstm_forward.1} parent=0 // loop_body
    %s22 = ssub.s32 %s17, 1
    %s23 = ssub.s32 %s17, 2
    %s24 = sadd.s32 %s17, 1
    %s25 = ssub.s32 %s17, %s24
    %p26 = scmp.eq.s32.totalorder %s25, 0
    %s28 = sadd.s32 %s27, 1
    %s29 = scalar_select %p26, %s27, %s28
    %p32 = pneg %p26
    %p33 = scmp.eq.s32.totalorder %s17, 1
    %p34 = por %p32, %p33
    %p35 = scmp.ne.s32.totalorder %s27, %s30
    %p36 = scmp.eq.s32.totalorder %s17, 0
    %p37 = por %p35, %p36
    %p38 = scmp.ne.s32.totalorder %s27, %s30
    %p39 = scmp.eq.s32.totalorder %s22, 1
    %p40 = por %p38, %p39
    %p41 = scmp.ne.s32.totalorder %s30, %s31
    %p42 = scmp.eq.s32.totalorder %s22, 0
    %p43 = por %p41, %p42
    %p44 = scmp.ne.s32.totalorder %s30, %s31
    %p45 = scmp.eq.s32.totalorder %s23, 1
    %p46 = por %p44, %p45
    %p48 = scmp.ne.s32.totalorder %s31, %s47
    %p49 = scmp.eq.s32.totalorder %s23, 0
    %p50 = por %p48, %p49
    %s52 = sadd.s32 %s51, 1
    %p55 = scmp.eq.s32.totalorder %s17, 1
    %p56 = scmp.ne.s32.totalorder %s51, %s53
    %p57 = scmp.eq.s32.totalorder %s17, 0
    %p58 = por %p56, %p57
    %p59 = scmp.ne.s32.totalorder %s51, %s53
    %p60 = scmp.eq.s32.totalorder %s22, 1
    %p61 = por %p59, %p60
    %p62 = scmp.ne.s32.totalorder %s53, %s54
    %p63 = scmp.eq.s32.totalorder %s22, 0
    %p64 = por %p62, %p63
    %p65 = scmp.ne.s32.totalorder %s53, %s54
    %p66 = scmp.eq.s32.totalorder %s23, 1
    %p67 = por %p65, %p66
    %p69 = scmp.ne.s32.totalorder %s54, %s68
    %p70 = scmp.eq.s32.totalorder %s23, 0
    %p71 = por %p69, %p70
    %s73 = sadd.s32 %s72, 1
    %p76 = scmp.eq.s32.totalorder %s17, 1
    %p77 = scmp.ne.s32.totalorder %s72, %s74
    %p78 = scmp.eq.s32.totalorder %s17, 0
    %p79 = por %p77, %p78
    %p80 = scmp.ne.s32.totalorder %s72, %s74
    %p81 = scmp.eq.s32.totalorder %s22, 1
    %p82 = por %p80, %p81
    %p83 = scmp.ne.s32.totalorder %s74, %s75
    %p84 = scmp.eq.s32.totalorder %s22, 0
    %p85 = por %p83, %p84
    %p86 = scmp.ne.s32.totalorder %s74, %s75
    %p87 = scmp.eq.s32.totalorder %s23, 1
    %p88 = por %p86, %p87
    %p90 = scmp.ne.s32.totalorder %s75, %s89
    %p91 = scmp.eq.s32.totalorder %s23, 0
    %p92 = por %p90, %p91
    %s94 = sadd.s32 %s93, 1
    %p97 = scmp.eq.s32.totalorder %s17, 1
    %p98 = scmp.ne.s32.totalorder %s93, %s95
    %p99 = scmp.eq.s32.totalorder %s17, 0
    %p100 = por %p98, %p99
    %p101 = scmp.ne.s32.totalorder %s93, %s95
    %p102 = scmp.eq.s32.totalorder %s22, 1
    %p103 = por %p101, %p102
    %p104 = scmp.ne.s32.totalorder %s95, %s96
    %p105 = scmp.eq.s32.totalorder %s22, 0
    %p106 = por %p104, %p105
    %p107 = scmp.ne.s32.totalorder %s95, %s96
    %p108 = scmp.eq.s32.totalorder %s23, 1
    %p109 = por %p107, %p108
    %p111 = scmp.ne.s32.totalorder %s96, %s110
    %p112 = scmp.eq.s32.totalorder %s23, 0
    %p113 = por %p111, %p112
    %s115 = sadd.s32 %s114, 1
    %p118 = scmp.eq.s32.totalorder %s17, 1
    %p119 = scmp.ne.s32.totalorder %s114, %s116
    %p120 = scmp.eq.s32.totalorder %s17, 0
    %p121 = por %p119, %p120
    %p122 = scmp.ne.s32.totalorder %s114, %s116
    %p123 = scmp.eq.s32.totalorder %s22, 1
    %p124 = por %p122, %p123
    %p125 = scmp.ne.s32.totalorder %s116, %s117
    %p126 = scmp.eq.s32.totalorder %s22, 0
    %p127 = por %p125, %p126
    %p128 = scmp.ne.s32.totalorder %s116, %s117
    %p129 = scmp.eq.s32.totalorder %s23, 1
    %p130 = por %p128, %p129
    %p132 = scmp.ne.s32.totalorder %s117, %s131
    %p133 = scmp.eq.s32.totalorder %s23, 0
    %p134 = por %p132, %p133
    %s136 = sadd.s32 %s135, 1
    %p139 = scmp.eq.s32.totalorder %s17, 1
    %p140 = scmp.ne.s32.totalorder %s135, %s137
    %p141 = scmp.eq.s32.totalorder %s17, 0
    %p142 = por %p140, %p141
    %p143 = scmp.ne.s32.totalorder %s135, %s137
    %p144 = scmp.eq.s32.totalorder %s22, 1
    %p145 = por %p143, %p144
    %p146 = scmp.ne.s32.totalorder %s137, %s138
    %p147 = scmp.eq.s32.totalorder %s22, 0
    %p148 = por %p146, %p147
    %p149 = scmp.ne.s32.totalorder %s137, %s138
    %p150 = scmp.eq.s32.totalorder %s23, 1
    %p151 = por %p149, %p150
    %p153 = scmp.ne.s32.totalorder %s138, %s152
    %p154 = scmp.eq.s32.totalorder %s23, 0
    %p155 = por %p153, %p154
    %s157 = sadd.s32 %s156, 1
    %p160 = scmp.eq.s32.totalorder %s17, 1
    %p161 = scmp.ne.s32.totalorder %s156, %s158
    %p162 = scmp.eq.s32.totalorder %s17, 0
    %p163 = por %p161, %p162
    %p164 = scmp.ne.s32.totalorder %s156, %s158
    %p165 = scmp.eq.s32.totalorder %s22, 1
    %p166 = por %p164, %p165
    %p167 = scmp.ne.s32.totalorder %s158, %s159
    %p168 = scmp.eq.s32.totalorder %s22, 0
    %p169 = por %p167, %p168
    %p170 = scmp.ne.s32.totalorder %s158, %s159
    %p171 = scmp.eq.s32.totalorder %s23, 1
    %p172 = por %p170, %p171
    %p174 = scmp.ne.s32.totalorder %s159, %s173
    %p175 = scmp.eq.s32.totalorder %s23, 0
    %p176 = por %p174, %p175
    %s178 = sadd.s32 %s177, 1
    %p181 = scmp.eq.s32.totalorder %s17, 1
    %p182 = scmp.ne.s32.totalorder %s177, %s179
    %p183 = scmp.eq.s32.totalorder %s17, 0
    %p184 = por %p182, %p183
    %p185 = scmp.ne.s32.totalorder %s177, %s179
    %p186 = scmp.eq.s32.totalorder %s22, 1
    %p187 = por %p185, %p186
    %p188 = scmp.ne.s32.totalorder %s179, %s180
    %p189 = scmp.eq.s32.totalorder %s22, 0
    %p190 = por %p188, %p189
    %p191 = scmp.ne.s32.totalorder %s179, %s180
    %p192 = scmp.eq.s32.totalorder %s23, 1
    %p193 = por %p191, %p192
    %p195 = scmp.ne.s32.totalorder %s180, %s194
    %p196 = scmp.eq.s32.totalorder %s23, 0
    %p197 = por %p195, %p196
    %s199 = sadd.s32 %s198, 1
    %p202 = scmp.eq.s32.totalorder %s17, 1
    %p203 = scmp.ne.s32.totalorder %s198, %s200
    %p204 = scmp.eq.s32.totalorder %s17, 0
    %p205 = por %p203, %p204
    %p206 = scmp.ne.s32.totalorder %s198, %s200
    %p207 = scmp.eq.s32.totalorder %s22, 1
    %p208 = por %p206, %p207
    %p209 = scmp.ne.s32.totalorder %s200, %s201
    %p210 = scmp.eq.s32.totalorder %s22, 0
    %p211 = por %p209, %p210
    %p212 = scmp.ne.s32.totalorder %s200, %s201
    %p213 = scmp.eq.s32.totalorder %s23, 1
    %p214 = por %p212, %p213
    %p216 = scmp.ne.s32.totalorder %s201, %s215
    %p217 = scmp.eq.s32.totalorder %s23, 0
    %p218 = por %p216, %p217
    %s220 = sadd.s32 %s219, 1
    %p223 = scmp.eq.s32.totalorder %s17, 1
    %p224 = scmp.ne.s32.totalorder %s219, %s221
    %p225 = scmp.eq.s32.totalorder %s17, 0
    %p226 = por %p224, %p225
    %p227 = scmp.ne.s32.totalorder %s219, %s221
    %p228 = scmp.eq.s32.totalorder %s22, 1
    %p229 = por %p227, %p228
    %p230 = scmp.ne.s32.totalorder %s221, %s222
    %p231 = scmp.eq.s32.totalorder %s22, 0
    %p232 = por %p230, %p231
    %p233 = scmp.ne.s32.totalorder %s221, %s222
    %p234 = scmp.eq.s32.totalorder %s23, 1
    %p235 = por %p233, %p234
    %p237 = scmp.ne.s32.totalorder %s222, %s236
    %p238 = scmp.eq.s32.totalorder %s23, 0
    %p239 = por %p237, %p238
    %s241 = sadd.s32 %s240, 1
    %p244 = scmp.eq.s32.totalorder %s17, 1
    %p245 = scmp.ne.s32.totalorder %s240, %s242
    %p246 = scmp.eq.s32.totalorder %s17, 0
    %p247 = por %p245, %p246
    %p248 = scmp.ne.s32.totalorder %s240, %s242
    %p249 = scmp.eq.s32.totalorder %s22, 1
    %p250 = por %p248, %p249
    %p251 = scmp.ne.s32.totalorder %s242, %s243
    %p252 = scmp.eq.s32.totalorder %s22, 0
    %p253 = por %p251, %p252
    %p254 = scmp.ne.s32.totalorder %s242, %s243
    %p255 = scmp.eq.s32.totalorder %s23, 1
    %p256 = por %p254, %p255
    %p258 = scmp.ne.s32.totalorder %s243, %s257
    %p259 = scmp.eq.s32.totalorder %s23, 0
    %p260 = por %p258, %p259
    %s261 = ssub.s32 %s17, %s24
    %p262 = scmp.eq.s32.totalorder %s261, 0
    %s264 = sadd.s32 %s263, 1
    %s265 = scalar_select %p262, %s263, %s264
    %p268 = pneg %p262
    %p269 = scmp.eq.s32.totalorder %s17, 1
    %p270 = por %p268, %p269
    %p271 = scmp.ne.s32.totalorder %s263, %s266
    %p272 = scmp.eq.s32.totalorder %s17, 0
    %p273 = por %p271, %p272
    %p274 = scmp.ne.s32.totalorder %s263, %s266
    %p275 = scmp.eq.s32.totalorder %s22, 1
    %p276 = por %p274, %p275
    %p277 = scmp.ne.s32.totalorder %s266, %s267
    %p278 = scmp.eq.s32.totalorder %s22, 0
    %p279 = por %p277, %p278
    %p280 = scmp.ne.s32.totalorder %s266, %s267
    %p281 = scmp.eq.s32.totalorder %s23, 1
    %p282 = por %p280, %p281
    %p284 = scmp.ne.s32.totalorder %s267, %s283
    %p285 = scmp.eq.s32.totalorder %s23, 0
    %p286 = por %p284, %p285
    %p287 = scmp.le.s32.totalorder 1, %s17
    %p288 = scmp.lt.s32.totalorder %s17, 3
    %p289 = pnand %p287, %p288
    %p290 = pneg %p289
    // Predicated region
    $region9: #{lstm_forward.1} parent=5 // pred_check
      _
    $region10: #{lstm_forward.1} parent=5 // pred_check_branch
      %292 = sbr.rel (%p289) target = $region12
    $region11: #{lstm_forward.1} parent=5 // pred_region
      %s293 = ssub.s32 %s17, 1
      // Predicated region
      $region13: #{lstm_forward.1} parent=11 // pred_check
        %p294 = pneg %p64
      $region14: #{lstm_forward.1} parent=11 // pred_check_branch
        %296 = sbr.rel (%p294) target = $region16
      $region15: #{lstm_forward.1} parent=11 // pred_region
        _
      $region16: #{lstm_forward.1} parent=11 // pred_fallthru
        _
      // Predicated region
      $region17: #{lstm_forward.1} parent=11 // pred_check
        %p297 = pneg %p85
      $region18: #{lstm_forward.1} parent=11 // pred_check_branch
        %299 = sbr.rel (%p297) target = $region20
      $region19: #{lstm_forward.1} parent=11 // pred_region
        _
      $region20: #{lstm_forward.1} parent=11 // pred_fallthru
        _
      // Predicated region
      $region21: #{lstm_forward.1} parent=11 // pred_check
        %p300 = pneg %p106
      $region22: #{lstm_forward.1} parent=11 // pred_check_branch
        %302 = sbr.rel (%p300) target = $region24
      $region23: #{lstm_forward.1} parent=11 // pred_region
        _
      $region24: #{lstm_forward.1} parent=11 // pred_fallthru
        _
      // Predicated region
      $region25: #{lstm_forward.1} parent=11 // pred_check
        %p303 = pneg %p127
      $region26: #{lstm_forward.1} parent=11 // pred_check_branch
        %305 = sbr.rel (%p303) target = $region28
      $region27: #{lstm_forward.1} parent=11 // pred_region
        _
      $region28: #{lstm_forward.1} parent=11 // pred_fallthru
        _
      // Predicated region
      $region29: #{lstm_forward.1} parent=11 // pred_check
        %p306 = pneg %p148
      $region30: #{lstm_forward.1} parent=11 // pred_check_branch
        %308 = sbr.rel (%p306) target = $region32
      $region31: #{lstm_forward.1} parent=11 // pred_region
        _
      $region32: #{lstm_forward.1} parent=11 // pred_fallthru
        _
      // Predicated region
      $region33: #{lstm_forward.1} parent=11 // pred_check
        %p309 = pneg %p169
      $region34: #{lstm_forward.1} parent=11 // pred_check_branch
        %311 = sbr.rel (%p309) target = $region36
      $region35: #{lstm_forward.1} parent=11 // pred_region
        _
      $region36: #{lstm_forward.1} parent=11 // pred_fallthru
        _
      // Predicated region
      $region37: #{lstm_forward.1} parent=11 // pred_check
        %p312 = pneg %p190
      $region38: #{lstm_forward.1} parent=11 // pred_check_branch
        %314 = sbr.rel (%p312) target = $region40
      $region39: #{lstm_forward.1} parent=11 // pred_region
        _
      $region40: #{lstm_forward.1} parent=11 // pred_fallthru
        _
      // Predicated region
      $region41: #{lstm_forward.1} parent=11 // pred_check
        %p315 = pneg %p211
      $region42: #{lstm_forward.1} parent=11 // pred_check_branch
        %317 = sbr.rel (%p315) target = $region44
      $region43: #{lstm_forward.1} parent=11 // pred_region
        _
      $region44: #{lstm_forward.1} parent=11 // pred_fallthru
        _
      // Predicated region
      $region45: #{lstm_forward.1} parent=11 // pred_check
        %p318 = pneg %p232
      $region46: #{lstm_forward.1} parent=11 // pred_check_branch
        %320 = sbr.rel (%p318) target = $region48
      $region47: #{lstm_forward.1} parent=11 // pred_region
        _
      $region48: #{lstm_forward.1} parent=11 // pred_fallthru
        _
      // Predicated region
      $region49: #{lstm_forward.1} parent=11 // pred_check
        %p321 = pneg %p253
      $region50: #{lstm_forward.1} parent=11 // pred_check_branch
        %323 = sbr.rel (%p321) target = $region52
      $region51: #{lstm_forward.1} parent=11 // pred_region
        _
      $region52: #{lstm_forward.1} parent=11 // pred_fallthru
        _
    $region12: #{lstm_forward.1} parent=5 // pred_fallthru
      _
    %p324 = scmp.lt.s32.totalorder %s17, 2
    // Predicated region
    $region53: #{lstm_forward.1} parent=5 // pred_check
      %p325 = pneg %p324
    $region54: #{lstm_forward.1} parent=5 // pred_check_branch
      %327 = sbr.rel (%p325) target = $region56
    $region55: #{lstm_forward.1} parent=5 // pred_region
      // Predicated region
      $region57: #{lstm_forward.1} parent=55 // pred_check
        %p328 = pneg %p37
      $region58: #{lstm_forward.1} parent=55 // pred_check_branch
        %330 = sbr.rel (%p328) target = $region60
      $region59: #{lstm_forward.1} parent=55 // pred_region
        %s331 = smul.u32 4, %s17
        %p332 = scmp.lt.s32.totalorder %s331, 7
        %s333 = scalar_select %p332, %s331, 7
        %s334 = smul.addr %s333, 8
        %s335 = scalar_lea.vmem %s0, %s334
        %s336 = smul.u32 4, %s17
      $region60: #{lstm_forward.1} parent=55 // pred_fallthru
        _
    $region56: #{lstm_forward.1} parent=5 // pred_fallthru
      _
    %p337 = scmp.le.s32.totalorder 1, %s17
    %p338 = scmp.lt.s32.totalorder %s17, 3
    %p339 = pnand %p337, %p338
    %p340 = pneg %p339
    // Predicated region
    $region61: #{lstm_forward.1} parent=5 // pred_check
      _
    $region62: #{lstm_forward.1} parent=5 // pred_check_branch
      %342 = sbr.rel (%p339) target = $region64
    $region63: #{lstm_forward.1} parent=5 // pred_region
      %s343 = ssub.s32 %s17, 1
      %s344 = smul.u32 4, %s22
      %p345 = scmp.lt.s32.totalorder %s344, 7
      %s346 = scalar_select %p345, %s344, 7
      %s347 = smul.addr %s346, 8
      %s348 = scalar_lea.vmem %s0, %s347
      %p349 = pneg %p43
      %p350 = pneg %p40
      %p351 = pneg %p64
      %p352 = pneg %p61
      %p353 = pneg %p85
      %p354 = pneg %p82
      %p355 = pneg %p106
      %p356 = pneg %p103
      %p357 = pneg %p127
      %p358 = pneg %p124
      %p359 = pneg %p148
      %p360 = pneg %p145
      %p361 = pneg %p169
      %p362 = pneg %p166
      %p363 = pneg %p190
      %p364 = pneg %p187
      %p365 = pneg %p211
      %p366 = pneg %p208
      %p367 = pneg %p232
      %p368 = pneg %p229
      %p369 = pneg %p253
      %p370 = pneg %p250
      %p371 = pneg %p279
      %p372 = pneg %p276
      %s373 = smul.u32 4, %s22
      %p374 = scmp.lt.s32.totalorder %s373, 7
      %s375 = scalar_select %p374, %s373, 7
      %s376 = smul.addr %s375, 8
      %s377 = scalar_lea.vmem %s11, %s376
      %s378 = smul.u32 4, %s22
      %p379 = scmp.lt.s32.totalorder %s378, 7
      %s380 = scalar_select %p379, %s378, 7
      %s381 = smul.addr %s380, 8
      %s382 = scalar_lea.vmem %s0, %s381
      %s383 = smul.u32 4, %s22
      %s384 = smul.u32 4, %s22
      %p385 = scmp.lt.s32.totalorder %s384, 7
      %s386 = scalar_select %p385, %s384, 7
      %s387 = smul.addr %s386, 8
      %s388 = scalar_lea.vmem %s11, %s387
      %s389 = smul.u32 4, %s22
      %p390 = scmp.eq.s32.totalorder %s22, 0
      // Predicated region
      $region65: #{lstm_forward.1} parent=63 // pred_check
        %p391 = pneg %p390
      $region66: #{lstm_forward.1} parent=63 // pred_check_branch
        %393 = sbr.rel (%p391) target = $region68
      $region67: #{lstm_forward.1} parent=63 // pred_region
        %v394 = vld [vmem:[%s1] sm:$0xff]
        %v395 = vld [vmem:[%s1 + $0x8] sm:$0xff]
        %396 = vst [vmem:[#allocation2] sm:$0xff] %v394
        %397 = vst [vmem:[#allocation2 + $0x8] sm:$0xff] %v395
        %v398 = vld [vmem:[%s2] sm:$0xff]
        %v399 = vld [vmem:[%s2 + $0x8] sm:$0xff]
        %400 = vst [vmem:[#allocation3] sm:$0xff] %v398
        %401 = vst [vmem:[#allocation3 + $0x8] sm:$0xff] %v399
      $region68: #{lstm_forward.1} parent=63 // pred_fallthru
        _
      %v402 = vlaneseq
      %v403 = vand.u32 %v402, 127
      %vm404 = vcmp.ge.s32.totalorder %v403, 64
      %vm405 = vcmp.lt.s32.totalorder %v403, 96
      %vm406 = vmand %vm404, %vm405
      %v407 = vsel %vm406, 2.0, 1.0
      %v408 = vsel %vm406, -1.0, 0.0
      %v409 = vld [vmem:[%s382] sm:$0xff]
      %v410 = vld [vmem:[%s382 + $0x8] sm:$0xff]
      %v411 = vld [vmem:[%s382 + $0x10] sm:$0xff]
      %v412 = vld [vmem:[%s382 + $0x18] sm:$0xff]
      %v413 = vld [vmem:[%s3] sm:$0xff]
      %v414 = vld [vmem:[%s3 + $0x8] sm:$0xff]
      %v415 = vld [vmem:[%s5] sm:$0x1]
      %v417 = vlaneseq
      %v418 = vshrl.u32 %v417, 7
      %v419 = vsub.s32 0, %v418
      %v420 = vrot.slane %v415, %v419
      %vm422 = vcmask 130048
      %v424 = vsel %vm422, %v409, 0
      %v427 = vsel %vm422, %v410, 0
      %v430 = vsel %vm422, %v411, 0
      %v433 = vsel %vm422, %v412, 0
      %435 = vmatprep.subr.mxu0 0.0
      %436 = vmatpush1.msra.mxu0 %v413
      %437 = vmatprep.subr.mxu0 0.0
      %438 = vmatpush1.msra.mxu0 %v414
      %439 = vmatprep.subr.mxu0 0.0
      %440 = vmatpush1.msra.mxu0 0.0
      %441 = vmatprep.subr.mxu0 0.0
      %442 = vmatpush1.msra.mxu0 0.0
      %443 = vmatprep.subr.mxu0 0.0
      %444 = vmatpush1.msra.mxu0 0.0
      %445 = vmatprep.subr.mxu0 0.0
      %446 = vmatpush1.msra.mxu0 0.0
      %447 = vmatprep.subr.mxu0 0.0
      %448 = vmatpush1.msra.mxu0 0.0
      %449 = vmatprep.subr.mxu0 0.0
      %450 = vmatpush1.msra.mxu0 0.0
      %451 = vmatprep.subr.mxu0 0.0
      %452 = vmatpush1.msra.mxu0 0.0
      %453 = vmatprep.subr.mxu0 0.0
      %454 = vmatpush1.msra.mxu0 0.0
      %455 = vmatprep.subr.mxu0 0.0
      %456 = vmatpush1.msra.mxu0 0.0
      %457 = vmatprep.subr.mxu0 0.0
      %458 = vmatpush1.msra.mxu0 0.0
      %459 = vmatprep.subr.mxu0 0.0
      %460 = vmatpush1.msra.mxu0 0.0
      %461 = vmatprep.subr.mxu0 0.0
      %462 = vmatpush1.msra.mxu0 0.0
      %463 = vmatprep.subr.mxu0 0.0
      %464 = vmatpush1.msra.mxu0 0.0
      %465 = vmatprep.subr.mxu0 0.0
      %466 = vmatpush1.msra.mxu0 0.0
      %467 = vmatprep.subr.mxu0 0.0
      %468 = vmatpush1.msra.mxu0 0.0
      %469 = vmatprep.subr.mxu0 0.0
      %470 = vmatpush1.msra.mxu0 0.0
      %471 = vmatprep.subr.mxu0 0.0
      %472 = vmatpush1.msra.mxu0 0.0
      %473 = vmatprep.subr.mxu0 0.0
      %474 = vmatpush1.msra.mxu0 0.0
      %475 = vmatprep.subr.mxu0 0.0
      %476 = vmatpush1.msra.mxu0 0.0
      %477 = vmatprep.subr.mxu0 0.0
      %478 = vmatpush1.msra.mxu0 0.0
      %479 = vmatprep.subr.mxu0 0.0
      %480 = vmatpush1.msra.mxu0 0.0
      %481 = vmatprep.subr.mxu0 0.0
      %482 = vmatpush1.msra.mxu0 0.0
      %483 = vmatprep.subr.mxu0 0.0
      %484 = vmatpush1.msra.mxu0 0.0
      %485 = vmatprep.subr.mxu0 0.0
      %486 = vmatpush1.msra.mxu0 0.0
      %487 = vmatprep.subr.mxu0 0.0
      %488 = vmatpush1.msra.mxu0 0.0
      %489 = vmatprep.subr.mxu0 0.0
      %490 = vmatpush1.msra.mxu0 0.0
      %491 = vmatprep.subr.mxu0 0.0
      %492 = vmatpush1.msra.mxu0 0.0
      %493 = vmatprep.subr.mxu0 0.0
      %494 = vmatpush1.msra.mxu0 0.0
      %495 = vmatprep.subr.mxu0 0.0
      %496 = vmatpush1.msra.mxu0 0.0
      %497 = vmatprep.subr.mxu0 0.0
      %498 = vmatpush1.msra.mxu0 0.0
      %499 = vmatprep.mubr.f32.mxu0 0.0
      %500 = vmatmul.mubr.f32.gmra.mrb[0].mxu0 %v424
      %v501 = vpop.f32.mrb[0].mxu0
      %v502 = vadd.f32 %v420, %v501
      %v503 = vpop.f32.mrb[0].mxu0
      %504 = vmatprep.mubr.f32.mxu0 0.0
      %505 = vmatmul.mubr.f32.gmra.mrb[0].mxu0 %v427
      %v506 = vpop.f32.mrb[0].mxu0
      %v507 = vadd.f32 %v420, %v506
      %v508 = vpop.f32.mrb[0].mxu0
      %509 = vmatprep.mubr.f32.mxu0 0.0
      %510 = vmatmul.mubr.f32.gmra.mrb[0].mxu0 %v430
      %v511 = vpop.f32.mrb[0].mxu0
      %v512 = vadd.f32 %v420, %v511
      %v513 = vpop.f32.mrb[0].mxu0
      %514 = vmatprep.mubr.f32.mxu0 0.0
      %515 = vmatmul.mubr.f32.gmra.mrb[0].mxu0 %v433
      %v516 = vpop.f32.mrb[0].mxu0
      %v517 = vadd.f32 %v420, %v516
      %v518 = vpop.f32.mrb[0].mxu0
      %519 = vdwg.mxu0
      %520 = vst [vmem:[#allocation4] sm:$0xff] %v502
      %521 = vst [vmem:[#allocation4 + $0x8] sm:$0xff] %v507
      %522 = vst [vmem:[#allocation4 + $0x10] sm:$0xff] %v512
      %523 = vst [vmem:[#allocation4 + $0x18] sm:$0xff] %v517
      %v524 = vld [vmem:[%s4] sm:$0xff]
      %v525 = vld [vmem:[%s4 + $0x8] sm:$0xff]
      %v526 = vld [vmem:[%s4 + $0x10] sm:$0xff]
      %v527 = vld [vmem:[%s4 + $0x18] sm:$0xff]
      %v528 = vld [vmem:[%s4 + $0x20] sm:$0xff]
      %v529 = vld [vmem:[%s4 + $0x28] sm:$0xff]
      %v530 = vld [vmem:[%s4 + $0x30] sm:$0xff]
      %v531 = vld [vmem:[%s4 + $0x38] sm:$0xff]
      %v532 = vld [vmem:[%s4 + $0x40] sm:$0xff]
      %v533 = vld [vmem:[%s4 + $0x48] sm:$0xff]
      %v534 = vld [vmem:[%s4 + $0x50] sm:$0xff]
      %v535 = vld [vmem:[%s4 + $0x58] sm:$0xff]
      %v536 = vld [vmem:[%s4 + $0x60] sm:$0xff]
      %v537 = vld [vmem:[%s4 + $0x68] sm:$0xff]
      %v538 = vld [vmem:[%s4 + $0x70] sm:$0xff]
      %v539 = vld [vmem:[%s4 + $0x78] sm:$0xff]
      %v540 = vld [vmem:[#allocation2] sm:$0xff]
      %v541 = vld [vmem:[#allocation3] sm:$0xff]
      %v542 = vld [vmem:[#allocation4] sm:$0xff]
      %543 = vmatprep.subr.mxu0 0.0
      %544 = vmatpush1.msra.mxu0 %v524
      %545 = vmatprep.subr.mxu0 0.0
      %546 = vmatpush1.msra.mxu0 %v525
      %547 = vmatprep.subr.mxu0 0.0
      %548 = vmatpush1.msra.mxu0 %v526
      %549 = vmatprep.subr.mxu0 0.0
      %550 = vmatpush1.msra.mxu0 %v527
      %551 = vmatprep.subr.mxu0 0.0
      %552 = vmatpush1.msra.mxu0 %v528
      %553 = vmatprep.subr.mxu0 0.0
      %554 = vmatpush1.msra.mxu0 %v529
      %555 = vmatprep.subr.mxu0 0.0
      %556 = vmatpush1.msra.mxu0 %v530
      %557 = vmatprep.subr.mxu0 0.0
      %558 = vmatpush1.msra.mxu0 %v531
      %559 = vmatprep.subr.mxu0 0.0
      %560 = vmatpush1.msra.mxu0 %v532
      %561 = vmatprep.subr.mxu0 0.0
      %562 = vmatpush1.msra.mxu0 %v533
      %563 = vmatprep.subr.mxu0 0.0
      %564 = vmatpush1.msra.mxu0 %v534
      %565 = vmatprep.subr.mxu0 0.0
      %566 = vmatpush1.msra.mxu0 %v535
      %567 = vmatprep.subr.mxu0 0.0
      %568 = vmatpush1.msra.mxu0 %v536
      %569 = vmatprep.subr.mxu0 0.0
      %570 = vmatpush1.msra.mxu0 %v537
      %571 = vmatprep.subr.mxu0 0.0
      %572 = vmatpush1.msra.mxu0 %v538
      %573 = vmatprep.subr.mxu0 0.0
      %574 = vmatpush1.msra.mxu0 %v539
      %575 = vmatprep.subr.mxu0 0.0
      %576 = vmatpush1.msra.mxu0 0.0
      %577 = vmatprep.subr.mxu0 0.0
      %578 = vmatpush1.msra.mxu0 0.0
      %579 = vmatprep.subr.mxu0 0.0
      %580 = vmatpush1.msra.mxu0 0.0
      %581 = vmatprep.subr.mxu0 0.0
      %582 = vmatpush1.msra.mxu0 0.0
      %583 = vmatprep.subr.mxu0 0.0
      %584 = vmatpush1.msra.mxu0 0.0
      %585 = vmatprep.subr.mxu0 0.0
      %586 = vmatpush1.msra.mxu0 0.0
      %587 = vmatprep.subr.mxu0 0.0
      %588 = vmatpush1.msra.mxu0 0.0
      %589 = vmatprep.subr.mxu0 0.0
      %590 = vmatpush1.msra.mxu0 0.0
      %591 = vmatprep.subr.mxu0 0.0
      %592 = vmatpush1.msra.mxu0 0.0
      %593 = vmatprep.subr.mxu0 0.0
      %594 = vmatpush1.msra.mxu0 0.0
      %595 = vmatprep.subr.mxu0 0.0
      %596 = vmatpush1.msra.mxu0 0.0
      %597 = vmatprep.subr.mxu0 0.0
      %598 = vmatpush1.msra.mxu0 0.0
      %599 = vmatprep.subr.mxu0 0.0
      %600 = vmatpush1.msra.mxu0 0.0
      %601 = vmatprep.subr.mxu0 0.0
      %602 = vmatpush1.msra.mxu0 0.0
      %603 = vmatprep.subr.mxu0 0.0
      %604 = vmatpush1.msra.mxu0 0.0
      %605 = vmatprep.subr.mxu0 0.0
      %606 = vmatpush1.msra.mxu0 0.0
      %607 = vmatprep.mubr.f32.mxu0 0.0
      %608 = vmatmul.mubr.f32.gmra.mrb[0].mxu0 %v540
      %v609 = vpop.f32.mrb[0].mxu0
      %v610 = vadd.f32 0.0, %v609
      %v611 = vpop.f32.mrb[0].mxu0
      %612 = vdwg.mxu0
      %v613 = vadd.f32 %v542, %v610
      %v614 = vmul.f32 %v613, %v407
      %v615 = vxor.u32 %v614, 2147483648
      %v616 = vmul.f32 %v615, 1.442695
      %v617 = vpow.pop %v616
      %v618 = vadd.f32 %v617, 1.0
      %v619 = vrcp.pop %v618
      %v620 = vmul.f32 1.0, %v619
      %v621 = vmul.f32 %v407, %v620
      %v622 = vadd.f32 %v621, %v408
      %623 = vrot.lane.b32.xlu0 %v622, 64
      %v624 = vpop.permute.xlu0 %623
      %v625 = vmul.f32 %v622, %v624
      %v626 = vmul.f32 %v622, %v541
      %627 = vrot.lane.b32.xlu0 %v625, 32
      %v628 = vpop.permute.xlu0 %627
      %v629 = vadd.f32 %v626, %v628
      %v630 = vtanh.pop %v629
      %v631 = vmul.f32 %v624, %v630
      %632 = vst [vmem:[#allocation5] sm:$0xff] %v631
      %s633 = scalar_lea.vmem [#allocation4], 8
      %v634 = vld [vmem:[%s633] sm:$0xff]
      %635 = vmatprep.subr.mxu0 0.0
      %636 = vmatpush1.msra.mxu0 %v524
      %637 = vmatprep.subr.mxu0 0.0
      %638 = vmatpush1.msra.mxu0 %v525
      %639 = vmatprep.subr.mxu0 0.0
      %640 = vmatpush1.msra.mxu0 %v526
      %641 = vmatprep.subr.mxu0 0.0
      %642 = vmatpush1.msra.mxu0 %v527
      %643 = vmatprep.subr.mxu0 0.0
      %644 = vmatpush1.msra.mxu0 %v528
      %645 = vmatprep.subr.mxu0 0.0
      %646 = vmatpush1.msra.mxu0 %v529
      %647 = vmatprep.subr.mxu0 0.0
      %648 = vmatpush1.msra.mxu0 %v530
      %649 = vmatprep.subr.mxu0 0.0
      %650 = vmatpush1.msra.mxu0 %v531
      %651 = vmatprep.subr.mxu0 0.0
      %652 = vmatpush1.msra.mxu0 %v532
      %653 = vmatprep.subr.mxu0 0.0
      %654 = vmatpush1.msra.mxu0 %v533
      %655 = vmatprep.subr.mxu0 0.0
      %656 = vmatpush1.msra.mxu0 %v534
      %657 = vmatprep.subr.mxu0 0.0
      %658 = vmatpush1.msra.mxu0 %v535
      %659 = vmatprep.subr.mxu0 0.0
      %660 = vmatpush1.msra.mxu0 %v536
      %661 = vmatprep.subr.mxu0 0.0
      %662 = vmatpush1.msra.mxu0 %v537
      %663 = vmatprep.subr.mxu0 0.0
      %664 = vmatpush1.msra.mxu0 %v538
      %665 = vmatprep.subr.mxu0 0.0
      %666 = vmatpush1.msra.mxu0 %v539
      %667 = vmatprep.subr.mxu0 0.0
      %668 = vmatpush1.msra.mxu0 0.0
      %669 = vmatprep.subr.mxu0 0.0
      %670 = vmatpush1.msra.mxu0 0.0
      %671 = vmatprep.subr.mxu0 0.0
      %672 = vmatpush1.msra.mxu0 0.0
      %673 = vmatprep.subr.mxu0 0.0
      %674 = vmatpush1.msra.mxu0 0.0
      %675 = vmatprep.subr.mxu0 0.0
      %676 = vmatpush1.msra.mxu0 0.0
      %677 = vmatprep.subr.mxu0 0.0
      %678 = vmatpush1.msra.mxu0 0.0
      %679 = vmatprep.subr.mxu0 0.0
      %680 = vmatpush1.msra.mxu0 0.0
      %681 = vmatprep.subr.mxu0 0.0
      %682 = vmatpush1.msra.mxu0 0.0
      %683 = vmatprep.subr.mxu0 0.0
      %684 = vmatpush1.msra.mxu0 0.0
      %685 = vmatprep.subr.mxu0 0.0
      %686 = vmatpush1.msra.mxu0 0.0
      %687 = vmatprep.subr.mxu0 0.0
      %688 = vmatpush1.msra.mxu0 0.0
      %689 = vmatprep.subr.mxu0 0.0
      %690 = vmatpush1.msra.mxu0 0.0
      %691 = vmatprep.subr.mxu0 0.0
      %692 = vmatpush1.msra.mxu0 0.0
      %693 = vmatprep.subr.mxu0 0.0
      %694 = vmatpush1.msra.mxu0 0.0
      %695 = vmatprep.subr.mxu0 0.0
      %696 = vmatpush1.msra.mxu0 0.0
      %697 = vmatprep.subr.mxu0 0.0
      %698 = vmatpush1.msra.mxu0 0.0
      %699 = vmatprep.mubr.f32.mxu0 0.0
      %700 = vmatmul.mubr.f32.gmra.mrb[0].mxu0 %v631
      %v701 = vpop.f32.mrb[0].mxu0
      %v702 = vadd.f32 0.0, %v701
      %v703 = vpop.f32.mrb[0].mxu0
      %704 = vdwg.mxu0
      %v705 = vadd.f32 %v634, %v702
      %v706 = vmul.f32 %v705, %v407
      %v707 = vxor.u32 %v706, 2147483648
      %v708 = vmul.f32 %v707, 1.442695
      %v709 = vpow.pop %v708
      %v710 = vadd.f32 %v709, 1.0
      %v711 = vrcp.pop %v710
      %v712 = vmul.f32 1.0, %v711
      %v713 = vmul.f32 %v407, %v712
      %v714 = vadd.f32 %v713, %v408
      %715 = vrot.lane.b32.xlu0 %v714, 64
      %v716 = vpop.permute.xlu0 %715
      %v717 = vmul.f32 %v714, %v716
      %v718 = vmul.f32 %v714, %v629
      %719 = vrot.lane.b32.xlu0 %v717, 32
      %v720 = vpop.permute.xlu0 %719
      %v721 = vadd.f32 %v718, %v720
      %v722 = vtanh.pop %v721
      %v723 = vmul.f32 %v716, %v722
      %s724 = scalar_lea.vmem [#allocation5], 8
      %725 = vst [vmem:[%s724] sm:$0xff] %v723
      %s726 = scalar_lea.vmem [#allocation4], 16
      %v727 = vld [vmem:[%s726] sm:$0xff]
      %728 = vmatprep.subr.mxu0 0.0
      %729 = vmatpush1.msra.mxu0 %v524
      %730 = vmatprep.subr.mxu0 0.0
      %731 = vmatpush1.msra.mxu0 %v525
      %732 = vmatprep.subr.mxu0 0.0
      %733 = vmatpush1.msra.mxu0 %v526
      %734 = vmatprep.subr.mxu0 0.0
      %735 = vmatpush1.msra.mxu0 %v527
      %736 = vmatprep.subr.mxu0 0.0
      %737 = vmatpush1.msra.mxu0 %v528
      %738 = vmatprep.subr.mxu0 0.0
      %739 = vmatpush1.msra.mxu0 %v529
      %740 = vmatprep.subr.mxu0 0.0
      %741 = vmatpush1.msra.mxu0 %v530
      %742 = vmatprep.subr.mxu0 0.0
      %743 = vmatpush1.msra.mxu0 %v531
      %744 = vmatprep.subr.mxu0 0.0
      %745 = vmatpush1.msra.mxu0 %v532
      %746 = vmatprep.subr.mxu0 0.0
      %747 = vmatpush1.msra.mxu0 %v533
      %748 = vmatprep.subr.mxu0 0.0
      %749 = vmatpush1.msra.mxu0 %v534
      %750 = vmatprep.subr.mxu0 0.0
      %751 = vmatpush1.msra.mxu0 %v535
      %752 = vmatprep.subr.mxu0 0.0
      %753 = vmatpush1.msra.mxu0 %v536
      %754 = vmatprep.subr.mxu0 0.0
      %755 = vmatpush1.msra.mxu0 %v537
      %756 = vmatprep.subr.mxu0 0.0
      %757 = vmatpush1.msra.mxu0 %v538
      %758 = vmatprep.subr.mxu0 0.0
      %759 = vmatpush1.msra.mxu0 %v539
      %760 = vmatprep.subr.mxu0 0.0
      %761 = vmatpush1.msra.mxu0 0.0
      %762 = vmatprep.subr.mxu0 0.0
      %763 = vmatpush1.msra.mxu0 0.0
      %764 = vmatprep.subr.mxu0 0.0
      %765 = vmatpush1.msra.mxu0 0.0
      %766 = vmatprep.subr.mxu0 0.0
      %767 = vmatpush1.msra.mxu0 0.0
      %768 = vmatprep.subr.mxu0 0.0
      %769 = vmatpush1.msra.mxu0 0.0
      %770 = vmatprep.subr.mxu0 0.0
      %771 = vmatpush1.msra.mxu0 0.0
      %772 = vmatprep.subr.mxu0 0.0
      %773 = vmatpush1.msra.mxu0 0.0
      %774 = vmatprep.subr.mxu0 0.0
      %775 = vmatpush1.msra.mxu0 0.0
      %776 = vmatprep.subr.mxu0 0.0
      %777 = vmatpush1.msra.mxu0 0.0
      %778 = vmatprep.subr.mxu0 0.0
      %779 = vmatpush1.msra.mxu0 0.0
      %780 = vmatprep.subr.mxu0 0.0
      %781 = vmatpush1.msra.mxu0 0.0
      %782 = vmatprep.subr.mxu0 0.0
      %783 = vmatpush1.msra.mxu0 0.0
      %784 = vmatprep.subr.mxu0 0.0
      %785 = vmatpush1.msra.mxu0 0.0
      %786 = vmatprep.subr.mxu0 0.0
      %787 = vmatpush1.msra.mxu0 0.0
      %788 = vmatprep.subr.mxu0 0.0
      %789 = vmatpush1.msra.mxu0 0.0
      %790 = vmatprep.subr.mxu0 0.0
      %791 = vmatpush1.msra.mxu0 0.0
      %792 = vmatprep.mubr.f32.mxu0 0.0
      %793 = vmatmul.mubr.f32.gmra.mrb[0].mxu0 %v723
      %v794 = vpop.f32.mrb[0].mxu0
      %v795 = vadd.f32 0.0, %v794
      %v796 = vpop.f32.mrb[0].mxu0
      %797 = vdwg.mxu0
      %v798 = vadd.f32 %v727, %v795
      %v799 = vmul.f32 %v798, %v407
      %v800 = vxor.u32 %v799, 2147483648
      %v801 = vmul.f32 %v800, 1.442695
      %v802 = vpow.pop %v801
      %v803 = vadd.f32 %v802, 1.0
      %v804 = vrcp.pop %v803
      %v805 = vmul.f32 1.0, %v804
      %v806 = vmul.f32 %v407, %v805
      %v807 = vadd.f32 %v806, %v408
      %808 = vrot.lane.b32.xlu0 %v807, 64
      %v809 = vpop.permute.xlu0 %808
      %v810 = vmul.f32 %v807, %v809
      %v811 = vmul.f32 %v807, %v721
      %812 = vrot.lane.b32.xlu0 %v810, 32
      %v813 = vpop.permute.xlu0 %812
      %v814 = vadd.f32 %v811, %v813
      %v815 = vtanh.pop %v814
      %v816 = vmul.f32 %v809, %v815
      %s817 = scalar_lea.vmem [#allocation5], 16
      %818 = vst [vmem:[%s817] sm:$0xff] %v816
      %s819 = scalar_lea.vmem [#allocation4], 24
      %v820 = vld [vmem:[%s819] sm:$0xff]
      %821 = vmatprep.subr.mxu0 0.0
      %822 = vmatpush1.msra.mxu0 %v524
      %823 = vmatprep.subr.mxu0 0.0
      %824 = vmatpush1.msra.mxu0 %v525
      %825 = vmatprep.subr.mxu0 0.0
      %826 = vmatpush1.msra.mxu0 %v526
      %827 = vmatprep.subr.mxu0 0.0
      %828 = vmatpush1.msra.mxu0 %v527
      %829 = vmatprep.subr.mxu0 0.0
      %830 = vmatpush1.msra.mxu0 %v528
      %831 = vmatprep.subr.mxu0 0.0
      %832 = vmatpush1.msra.mxu0 %v529
      %833 = vmatprep.subr.mxu0 0.0
      %834 = vmatpush1.msra.mxu0 %v530
      %835 = vmatprep.subr.mxu0 0.0
      %836 = vmatpush1.msra.mxu0 %v531
      %837 = vmatprep.subr.mxu0 0.0
      %838 = vmatpush1.msra.mxu0 %v532
      %839 = vmatprep.subr.mxu0 0.0
      %840 = vmatpush1.msra.mxu0 %v533
      %841 = vmatprep.subr.mxu0 0.0
      %842 = vmatpush1.msra.mxu0 %v534
      %843 = vmatprep.subr.mxu0 0.0
      %844 = vmatpush1.msra.mxu0 %v535
      %845 = vmatprep.subr.mxu0 0.0
      %846 = vmatpush1.msra.mxu0 %v536
      %847 = vmatprep.subr.mxu0 0.0
      %848 = vmatpush1.msra.mxu0 %v537
      %849 = vmatprep.subr.mxu0 0.0
      %850 = vmatpush1.msra.mxu0 %v538
      %851 = vmatprep.subr.mxu0 0.0
      %852 = vmatpush1.msra.mxu0 %v539
      %853 = vmatprep.subr.mxu0 0.0
      %854 = vmatpush1.msra.mxu0 0.0
      %855 = vmatprep.subr.mxu0 0.0
      %856 = vmatpush1.msra.mxu0 0.0
      %857 = vmatprep.subr.mxu0 0.0
      %858 = vmatpush1.msra.mxu0 0.0
      %859 = vmatprep.subr.mxu0 0.0
      %860 = vmatpush1.msra.mxu0 0.0
      %861 = vmatprep.subr.mxu0 0.0
      %862 = vmatpush1.msra.mxu0 0.0
      %863 = vmatprep.subr.mxu0 0.0
      %864 = vmatpush1.msra.mxu0 0.0
      %865 = vmatprep.subr.mxu0 0.0
      %866 = vmatpush1.msra.mxu0 0.0
      %867 = vmatprep.subr.mxu0 0.0
      %868 = vmatpush1.msra.mxu0 0.0
      %869 = vmatprep.subr.mxu0 0.0
      %870 = vmatpush1.msra.mxu0 0.0
      %871 = vmatprep.subr.mxu0 0.0
      %872 = vmatpush1.msra.mxu0 0.0
      %873 = vmatprep.subr.mxu0 0.0
      %874 = vmatpush1.msra.mxu0 0.0
      %875 = vmatprep.subr.mxu0 0.0
      %876 = vmatpush1.msra.mxu0 0.0
      %877 = vmatprep.subr.mxu0 0.0
      %878 = vmatpush1.msra.mxu0 0.0
      %879 = vmatprep.subr.mxu0 0.0
      %880 = vmatpush1.msra.mxu0 0.0
      %881 = vmatprep.subr.mxu0 0.0
      %882 = vmatpush1.msra.mxu0 0.0
      %883 = vmatprep.subr.mxu0 0.0
      %884 = vmatpush1.msra.mxu0 0.0
      %885 = vmatprep.mubr.f32.mxu0 0.0
      %886 = vmatmul.mubr.f32.gmra.mrb[0].mxu0 %v816
      %v887 = vpop.f32.mrb[0].mxu0
      %v888 = vadd.f32 0.0, %v887
      %v889 = vpop.f32.mrb[0].mxu0
      %890 = vdwg.mxu0
      %v891 = vadd.f32 %v820, %v888
      %v892 = vmul.f32 %v891, %v407
      %v893 = vxor.u32 %v892, 2147483648
      %v894 = vmul.f32 %v893, 1.442695
      %v895 = vpow.pop %v894
      %v896 = vadd.f32 %v895, 1.0
      %v897 = vrcp.pop %v896
      %v898 = vmul.f32 1.0, %v897
      %v899 = vmul.f32 %v407, %v898
      %v900 = vadd.f32 %v899, %v408
      %901 = vrot.lane.b32.xlu0 %v900, 64
      %v902 = vpop.permute.xlu0 %901
      %v903 = vmul.f32 %v900, %v902
      %v904 = vmul.f32 %v900, %v814
      %905 = vrot.lane.b32.xlu0 %v903, 32
      %v906 = vpop.permute.xlu0 %905
      %v907 = vadd.f32 %v904, %v906
      %v908 = vtanh.pop %v907
      %v909 = vmul.f32 %v902, %v908
      %s910 = scalar_lea.vmem [#allocation5], 24
      %911 = vst [vmem:[%s910] sm:$0xff] %v909
      %912 = vst [vmem:[#allocation2] sm:$0xff] %v909
      %913 = vst [vmem:[#allocation3] sm:$0xff] %v907
      %v914 = vld [vmem:[#allocation5] sm:$0xff]
      %v915 = vld [vmem:[#allocation5 + $0x8] sm:$0xff]
      %v916 = vld [vmem:[#allocation5 + $0x10] sm:$0xff]
      %v917 = vld [vmem:[#allocation5 + $0x18] sm:$0xff]
      %v918 = vld [vmem:[%s6] sm:$0xff]
      %v919 = vld [vmem:[%s6 + $0x8] sm:$0xff]
      %v920 = vld [vmem:[%s6 + $0x10] sm:$0xff]
      %v921 = vld [vmem:[%s6 + $0x18] sm:$0xff]
      %v922 = vld [vmem:[%s6 + $0x20] sm:$0xff]
      %v923 = vld [vmem:[%s6 + $0x28] sm:$0xff]
      %v924 = vld [vmem:[%s6 + $0x30] sm:$0xff]
      %v925 = vld [vmem:[%s6 + $0x38] sm:$0xff]
      %v926 = vld [vmem:[%s6 + $0x40] sm:$0xff]
      %v927 = vld [vmem:[%s6 + $0x48] sm:$0xff]
      %v928 = vld [vmem:[%s6 + $0x50] sm:$0xff]
      %v929 = vld [vmem:[%s6 + $0x58] sm:$0xff]
      %v930 = vld [vmem:[%s6 + $0x60] sm:$0xff]
      %v931 = vld [vmem:[%s6 + $0x68] sm:$0xff]
      %v932 = vld [vmem:[%s6 + $0x70] sm:$0xff]
      %v933 = vld [vmem:[%s6 + $0x78] sm:$0xff]
      %v934 = vld [vmem:[%s8] sm:$0x1]
      %v936 = vlaneseq
      %v937 = vshrl.u32 %v936, 7
      %v938 = vsub.s32 0, %v937
      %v939 = vrot.slane %v934, %v938
      %941 = vmatprep.subr.mxu0 0.0
      %942 = vmatpush1.msra.mxu0 %v918
      %943 = vmatprep.subr.mxu0 0.0
      %944 = vmatpush1.msra.mxu0 %v919
      %945 = vmatprep.subr.mxu0 0.0
      %946 = vmatpush1.msra.mxu0 %v920
      %947 = vmatprep.subr.mxu0 0.0
      %948 = vmatpush1.msra.mxu0 %v921
      %949 = vmatprep.subr.mxu0 0.0
      %950 = vmatpush1.msra.mxu0 %v922
      %951 = vmatprep.subr.mxu0 0.0
      %952 = vmatpush1.msra.mxu0 %v923
      %953 = vmatprep.subr.mxu0 0.0
      %954 = vmatpush1.msra.mxu0 %v924
      %955 = vmatprep.subr.mxu0 0.0
      %956 = vmatpush1.msra.mxu0 %v925
      %957 = vmatprep.subr.mxu0 0.0
      %958 = vmatpush1.msra.mxu0 %v926
      %959 = vmatprep.subr.mxu0 0.0
      %960 = vmatpush1.msra.mxu0 %v927
      %961 = vmatprep.subr.mxu0 0.0
      %962 = vmatpush1.msra.mxu0 %v928
      %963 = vmatprep.subr.mxu0 0.0
      %964 = vmatpush1.msra.mxu0 %v929
      %965 = vmatprep.subr.mxu0 0.0
      %966 = vmatpush1.msra.mxu0 %v930
      %967 = vmatprep.subr.mxu0 0.0
      %968 = vmatpush1.msra.mxu0 %v931
      %969 = vmatprep.subr.mxu0 0.0
      %970 = vmatpush1.msra.mxu0 %v932
      %971 = vmatprep.subr.mxu0 0.0
      %972 = vmatpush1.msra.mxu0 %v933
      %973 = vmatprep.subr.mxu0 0.0
      %974 = vmatpush1.msra.mxu0 0.0
      %975 = vmatprep.subr.mxu0 0.0
      %976 = vmatpush1.msra.mxu0 0.0
      %977 = vmatprep.subr.mxu0 0.0
      %978 = vmatpush1.msra.mxu0 0.0
      %979 = vmatprep.subr.mxu0 0.0
      %980 = vmatpush1.msra.mxu0 0.0
      %981 = vmatprep.subr.mxu0 0.0
      %982 = vmatpush1.msra.mxu0 0.0
      %983 = vmatprep.subr.mxu0 0.0
      %984 = vmatpush1.msra.mxu0 0.0
      %985 = vmatprep.subr.mxu0 0.0
      %986 = vmatpush1.msra.mxu0 0.0
      %987 = vmatprep.subr.mxu0 0.0
      %988 = vmatpush1.msra.mxu0 0.0
      %989 = vmatprep.subr.mxu0 0.0
      %990 = vmatpush1.msra.mxu0 0.0
      %991 = vmatprep.subr.mxu0 0.0
      %992 = vmatpush1.msra.mxu0 0.0
      %993 = vmatprep.subr.mxu0 0.0
      %994 = vmatpush1.msra.mxu0 0.0
      %995 = vmatprep.subr.mxu0 0.0
      %996 = vmatpush1.msra.mxu0 0.0
      %997 = vmatprep.subr.mxu0 0.0
      %998 = vmatpush1.msra.mxu0 0.0
      %999 = vmatprep.subr.mxu0 0.0
      %1000 = vmatpush1.msra.mxu0 0.0
      %1001 = vmatprep.subr.mxu0 0.0
      %1002 = vmatpush1.msra.mxu0 0.0
      %1003 = vmatprep.subr.mxu0 0.0
      %1004 = vmatpush1.msra.mxu0 0.0
      %1005 = vmatprep.mubr.f32.mxu0 0.0
      %1006 = vmatmul.mubr.f32.gmra.mrb[0].mxu0 %v914
      %v1007 = vpop.f32.mrb[0].mxu0
      %v1008 = vadd.f32 %v939, %v1007
      %v1009 = vpop.f32.mrb[0].mxu0
      %1010 = vmatprep.mubr.f32.mxu0 0.0
      %1011 = vmatmul.mubr.f32.gmra.mrb[0].mxu0 %v915
      %v1012 = vpop.f32.mrb[0].mxu0
      %v1013 = vadd.f32 %v939, %v1012
      %v1014 = vpop.f32.mrb[0].mxu0
      %1015 = vmatprep.mubr.f32.mxu0 0.0
      %1016 = vmatmul.mubr.f32.gmra.mrb[0].mxu0 %v916
      %v1017 = vpop.f32.mrb[0].mxu0
      %v1018 = vadd.f32 %v939, %v1017
      %v1019 = vpop.f32.mrb[0].mxu0
      %1020 = vmatprep.mubr.f32.mxu0 0.0
      %1021 = vmatmul.mubr.f32.gmra.mrb[0].mxu0 %v917
      %v1022 = vpop.f32.mrb[0].mxu0
      %v1023 = vadd.f32 %v939, %v1022
      %v1024 = vpop.f32.mrb[0].mxu0
      %1025 = vdwg.mxu0
      %1026 = vst [vmem:[#allocation4] sm:$0xff] %v1008
      %1027 = vst [vmem:[#allocation4 + $0x8] sm:$0xff] %v1013
      %1028 = vst [vmem:[#allocation4 + $0x10] sm:$0xff] %v1018
      %1029 = vst [vmem:[#allocation4 + $0x18] sm:$0xff] %v1023
      %v1030 = vld [vmem:[%s7] sm:$0xff]
      %v1031 = vld [vmem:[%s7 + $0x8] sm:$0xff]
      %v1032 = vld [vmem:[%s7 + $0x10] sm:$0xff]
      %v1033 = vld [vmem:[%s7 + $0x18] sm:$0xff]
      %v1034 = vld [vmem:[%s7 + $0x20] sm:$0xff]
      %v1035 = vld [vmem:[%s7 + $0x28] sm:$0xff]
      %v1036 = vld [vmem:[%s7 + $0x30] sm:$0xff]
      %v1037 = vld [vmem:[%s7 + $0x38] sm:$0xff]
      %v1038 = vld [vmem:[%s7 + $0x40] sm:$0xff]
      %v1039 = vld [vmem:[%s7 + $0x48] sm:$0xff]
      %v1040 = vld [vmem:[%s7 + $0x50] sm:$0xff]
      %v1041 = vld [vmem:[%s7 + $0x58] sm:$0xff]
      %v1042 = vld [vmem:[%s7 + $0x60] sm:$0xff]
      %v1043 = vld [vmem:[%s7 + $0x68] sm:$0xff]
      %v1044 = vld [vmem:[%s7 + $0x70] sm:$0xff]
      %v1045 = vld [vmem:[%s7 + $0x78] sm:$0xff]
      %s1046 = scalar_lea.vmem [#allocation2], 8
      %v1047 = vld [vmem:[%s1046] sm:$0xff]
      %s1048 = scalar_lea.vmem [#allocation3], 8
      %v1049 = vld [vmem:[%s1048] sm:$0xff]
      %v1050 = vld [vmem:[#allocation4] sm:$0xff]
      %1051 = vmatprep.subr.mxu0 0.0
      %1052 = vmatpush1.msra.mxu0 %v1030
      %1053 = vmatprep.subr.mxu0 0.0
      %1054 = vmatpush1.msra.mxu0 %v1031
      %1055 = vmatprep.subr.mxu0 0.0
      %1056 = vmatpush1.msra.mxu0 %v1032
      %1057 = vmatprep.subr.mxu0 0.0
      %1058 = vmatpush1.msra.mxu0 %v1033
      %1059 = vmatprep.subr.mxu0 0.0
      %1060 = vmatpush1.msra.mxu0 %v1034
      %1061 = vmatprep.subr.mxu0 0.0
      %1062 = vmatpush1.msra.mxu0 %v1035
      %1063 = vmatprep.subr.mxu0 0.0
      %1064 = vmatpush1.msra.mxu0 %v1036
      %1065 = vmatprep.subr.mxu0 0.0
      %1066 = vmatpush1.msra.mxu0 %v1037
      %1067 = vmatprep.subr.mxu0 0.0
      %1068 = vmatpush1.msra.mxu0 %v1038
      %1069 = vmatprep.subr.mxu0 0.0
      %1070 = vmatpush1.msra.mxu0 %v1039
      %1071 = vmatprep.subr.mxu0 0.0
      %1072 = vmatpush1.msra.mxu0 %v1040
      %1073 = vmatprep.subr.mxu0 0.0
      %1074 = vmatpush1.msra.mxu0 %v1041
      %1075 = vmatprep.subr.mxu0 0.0
      %1076 = vmatpush1.msra.mxu0 %v1042
      %1077 = vmatprep.subr.mxu0 0.0
      %1078 = vmatpush1.msra.mxu0 %v1043
      %1079 = vmatprep.subr.mxu0 0.0
      %1080 = vmatpush1.msra.mxu0 %v1044
      %1081 = vmatprep.subr.mxu0 0.0
      %1082 = vmatpush1.msra.mxu0 %v1045
      %1083 = vmatprep.subr.mxu0 0.0
      %1084 = vmatpush1.msra.mxu0 0.0
      %1085 = vmatprep.subr.mxu0 0.0
      %1086 = vmatpush1.msra.mxu0 0.0
      %1087 = vmatprep.subr.mxu0 0.0
      %1088 = vmatpush1.msra.mxu0 0.0
      %1089 = vmatprep.subr.mxu0 0.0
      %1090 = vmatpush1.msra.mxu0 0.0
      %1091 = vmatprep.subr.mxu0 0.0
      %1092 = vmatpush1.msra.mxu0 0.0
      %1093 = vmatprep.subr.mxu0 0.0
      %1094 = vmatpush1.msra.mxu0 0.0
      %1095 = vmatprep.subr.mxu0 0.0
      %1096 = vmatpush1.msra.mxu0 0.0
      %1097 = vmatprep.subr.mxu0 0.0
      %1098 = vmatpush1.msra.mxu0 0.0
      %1099 = vmatprep.subr.mxu0 0.0
      %1100 = vmatpush1.msra.mxu0 0.0
      %1101 = vmatprep.subr.mxu0 0.0
      %1102 = vmatpush1.msra.mxu0 0.0
      %1103 = vmatprep.subr.mxu0 0.0
      %1104 = vmatpush1.msra.mxu0 0.0
      %1105 = vmatprep.subr.mxu0 0.0
      %1106 = vmatpush1.msra.mxu0 0.0
      %1107 = vmatprep.subr.mxu0 0.0
      %1108 = vmatpush1.msra.mxu0 0.0
      %1109 = vmatprep.subr.mxu0 0.0
      %1110 = vmatpush1.msra.mxu0 0.0
      %1111 = vmatprep.subr.mxu0 0.0
      %1112 = vmatpush1.msra.mxu0 0.0
      %1113 = vmatprep.subr.mxu0 0.0
      %1114 = vmatpush1.msra.mxu0 0.0
      %1115 = vmatprep.mubr.f32.mxu0 0.0
      %1116 = vmatmul.mubr.f32.gmra.mrb[0].mxu0 %v1047
      %v1117 = vpop.f32.mrb[0].mxu0
      %v1118 = vadd.f32 0.0, %v1117
      %v1119 = vpop.f32.mrb[0].mxu0
      %1120 = vdwg.mxu0
      %v1121 = vadd.f32 %v1050, %v1118
      %v1122 = vmul.f32 %v1121, %v407
      %v1123 = vxor.u32 %v1122, 2147483648
      %v1124 = vmul.f32 %v1123, 1.442695
      %v1125 = vpow.pop %v1124
      %v1126 = vadd.f32 %v1125, 1.0
      %v1127 = vrcp.pop %v1126
      %v1128 = vmul.f32 1.0, %v1127
      %v1129 = vmul.f32 %v407, %v1128
      %v1130 = vadd.f32 %v1129, %v408
      %1131 = vrot.lane.b32.xlu0 %v1130, 64
      %v1132 = vpop.permute.xlu0 %1131
      %v1133 = vmul.f32 %v1130, %v1132
      %v1134 = vmul.f32 %v1130, %v1049
      %1135 = vrot.lane.b32.xlu0 %v1133, 32
      %v1136 = vpop.permute.xlu0 %1135
      %v1137 = vadd.f32 %v1134, %v1136
      %v1138 = vtanh.pop %v1137
      %v1139 = vmul.f32 %v1132, %v1138
      %1140 = vst [vmem:[#allocation5] sm:$0xff] %v1139
      %v1141 = vld [vmem:[%s633] sm:$0xff]
      %1142 = vmatprep.subr.mxu0 0.0
      %1143 = vmatpush1.msra.mxu0 %v1030
      %1144 = vmatprep.subr.mxu0 0.0
      %1145 = vmatpush1.msra.mxu0 %v1031
      %1146 = vmatprep.subr.mxu0 0.0
      %1147 = vmatpush1.msra.mxu0 %v1032
      %1148 = vmatprep.subr.mxu0 0.0
      %1149 = vmatpush1.msra.mxu0 %v1033
      %1150 = vmatprep.subr.mxu0 0.0
      %1151 = vmatpush1.msra.mxu0 %v1034
      %1152 = vmatprep.subr.mxu0 0.0
      %1153 = vmatpush1.msra.mxu0 %v1035
      %1154 = vmatprep.subr.mxu0 0.0
      %1155 = vmatpush1.msra.mxu0 %v1036
      %1156 = vmatprep.subr.mxu0 0.0
      %1157 = vmatpush1.msra.mxu0 %v1037
      %1158 = vmatprep.subr.mxu0 0.0
      %1159 = vmatpush1.msra.mxu0 %v1038
      %1160 = vmatprep.subr.mxu0 0.0
      %1161 = vmatpush1.msra.mxu0 %v1039
      %1162 = vmatprep.subr.mxu0 0.0
      %1163 = vmatpush1.msra.mxu0 %v1040
      %1164 = vmatprep.subr.mxu0 0.0
      %1165 = vmatpush1.msra.mxu0 %v1041
      %1166 = vmatprep.subr.mxu0 0.0
      %1167 = vmatpush1.msra.mxu0 %v1042
      %1168 = vmatprep.subr.mxu0 0.0
      %1169 = vmatpush1.msra.mxu0 %v1043
      %1170 = vmatprep.subr.mxu0 0.0
      %1171 = vmatpush1.msra.mxu0 %v1044
      %1172 = vmatprep.subr.mxu0 0.0
      %1173 = vmatpush1.msra.mxu0 %v1045
      %1174 = vmatprep.subr.mxu0 0.0
      %1175 = vmatpush1.msra.mxu0 0.0
      %1176 = vmatprep.subr.mxu0 0.0
      %1177 = vmatpush1.msra.mxu0 0.0
      %1178 = vmatprep.subr.mxu0 0.0
      %1179 = vmatpush1.msra.mxu0 0.0
      %1180 = vmatprep.subr.mxu0 0.0
      %1181 = vmatpush1.msra.mxu0 0.0
      %1182 = vmatprep.subr.mxu0 0.0
      %1183 = vmatpush1.msra.mxu0 0.0
      %1184 = vmatprep.subr.mxu0 0.0
      %1185 = vmatpush1.msra.mxu0 0.0
      %1186 = vmatprep.subr.mxu0 0.0
      %1187 = vmatpush1.msra.mxu0 0.0
      %1188 = vmatprep.subr.mxu0 0.0
      %1189 = vmatpush1.msra.mxu0 0.0
      %1190 = vmatprep.subr.mxu0 0.0
      %1191 = vmatpush1.msra.mxu0 0.0
      %1192 = vmatprep.subr.mxu0 0.0
      %1193 = vmatpush1.msra.mxu0 0.0
      %1194 = vmatprep.subr.mxu0 0.0
      %1195 = vmatpush1.msra.mxu0 0.0
      %1196 = vmatprep.subr.mxu0 0.0
      %1197 = vmatpush1.msra.mxu0 0.0
      %1198 = vmatprep.subr.mxu0 0.0
      %1199 = vmatpush1.msra.mxu0 0.0
      %1200 = vmatprep.subr.mxu0 0.0
      %1201 = vmatpush1.msra.mxu0 0.0
      %1202 = vmatprep.subr.mxu0 0.0
      %1203 = vmatpush1.msra.mxu0 0.0
      %1204 = vmatprep.subr.mxu0 0.0
      %1205 = vmatpush1.msra.mxu0 0.0
      %1206 = vmatprep.mubr.f32.mxu0 0.0
      %1207 = vmatmul.mubr.f32.gmra.mrb[0].mxu0 %v1139
      %v1208 = vpop.f32.mrb[0].mxu0
      %v1209 = vadd.f32 0.0, %v1208
      %v1210 = vpop.f32.mrb[0].mxu0
      %1211 = vdwg.mxu0
      %v1212 = vadd.f32 %v1141, %v1209
      %v1213 = vmul.f32 %v1212, %v407
      %v1214 = vxor.u32 %v1213, 2147483648
      %v1215 = vmul.f32 %v1214, 1.442695
      %v1216 = vpow.pop %v1215
      %v1217 = vadd.f32 %v1216, 1.0
      %v1218 = vrcp.pop %v1217
      %v1219 = vmul.f32 1.0, %v1218
      %v1220 = vmul.f32 %v407, %v1219
      %v1221 = vadd.f32 %v1220, %v408
      %1222 = vrot.lane.b32.xlu0 %v1221, 64
      %v1223 = vpop.permute.xlu0 %1222
      %v1224 = vmul.f32 %v1221, %v1223
      %v1225 = vmul.f32 %v1221, %v1137
      %1226 = vrot.lane.b32.xlu0 %v1224, 32
      %v1227 = vpop.permute.xlu0 %1226
      %v1228 = vadd.f32 %v1225, %v1227
      %v1229 = vtanh.pop %v1228
      %v1230 = vmul.f32 %v1223, %v1229
      %1231 = vst [vmem:[%s724] sm:$0xff] %v1230
      %v1232 = vld [vmem:[%s726] sm:$0xff]
      %1233 = vmatprep.subr.mxu0 0.0
      %1234 = vmatpush1.msra.mxu0 %v1030
      %1235 = vmatprep.subr.mxu0 0.0
      %1236 = vmatpush1.msra.mxu0 %v1031
      %1237 = vmatprep.subr.mxu0 0.0
      %1238 = vmatpush1.msra.mxu0 %v1032
      %1239 = vmatprep.subr.mxu0 0.0
      %1240 = vmatpush1.msra.mxu0 %v1033
      %1241 = vmatprep.subr.mxu0 0.0
      %1242 = vmatpush1.msra.mxu0 %v1034
      %1243 = vmatprep.subr.mxu0 0.0
      %1244 = vmatpush1.msra.mxu0 %v1035
      %1245 = vmatprep.subr.mxu0 0.0
      %1246 = vmatpush1.msra.mxu0 %v1036
      %1247 = vmatprep.subr.mxu0 0.0
      %1248 = vmatpush1.msra.mxu0 %v1037
      %1249 = vmatprep.subr.mxu0 0.0
      %1250 = vmatpush1.msra.mxu0 %v1038
      %1251 = vmatprep.subr.mxu0 0.0
      %1252 = vmatpush1.msra.mxu0 %v1039
      %1253 = vmatprep.subr.mxu0 0.0
      %1254 = vmatpush1.msra.mxu0 %v1040
      %1255 = vmatprep.subr.mxu0 0.0
      %1256 = vmatpush1.msra.mxu0 %v1041
      %1257 = vmatprep.subr.mxu0 0.0
      %1258 = vmatpush1.msra.mxu0 %v1042
      %1259 = vmatprep.subr.mxu0 0.0
      %1260 = vmatpush1.msra.mxu0 %v1043
      %1261 = vmatprep.subr.mxu0 0.0
      %1262 = vmatpush1.msra.mxu0 %v1044
      %1263 = vmatprep.subr.mxu0 0.0
      %1264 = vmatpush1.msra.mxu0 %v1045
      %1265 = vmatprep.subr.mxu0 0.0
      %1266 = vmatpush1.msra.mxu0 0.0
      %1267 = vmatprep.subr.mxu0 0.0
      %1268 = vmatpush1.msra.mxu0 0.0
      %1269 = vmatprep.subr.mxu0 0.0
      %1270 = vmatpush1.msra.mxu0 0.0
      %1271 = vmatprep.subr.mxu0 0.0
      %1272 = vmatpush1.msra.mxu0 0.0
      %1273 = vmatprep.subr.mxu0 0.0
      %1274 = vmatpush1.msra.mxu0 0.0
      %1275 = vmatprep.subr.mxu0 0.0
      %1276 = vmatpush1.msra.mxu0 0.0
      %1277 = vmatprep.subr.mxu0 0.0
      %1278 = vmatpush1.msra.mxu0 0.0
      %1279 = vmatprep.subr.mxu0 0.0
      %1280 = vmatpush1.msra.mxu0 0.0
      %1281 = vmatprep.subr.mxu0 0.0
      %1282 = vmatpush1.msra.mxu0 0.0
      %1283 = vmatprep.subr.mxu0 0.0
      %1284 = vmatpush1.msra.mxu0 0.0
      %1285 = vmatprep.subr.mxu0 0.0
      %1286 = vmatpush1.msra.mxu0 0.0
      %1287 = vmatprep.subr.mxu0 0.0
      %1288 = vmatpush1.msra.mxu0 0.0
      %1289 = vmatprep.subr.mxu0 0.0
      %1290 = vmatpush1.msra.mxu0 0.0
      %1291 = vmatprep.subr.mxu0 0.0
      %1292 = vmatpush1.msra.mxu0 0.0
      %1293 = vmatprep.subr.mxu0 0.0
      %1294 = vmatpush1.msra.mxu0 0.0
      %1295 = vmatprep.subr.mxu0 0.0
      %1296 = vmatpush1.msra.mxu0 0.0
      %1297 = vmatprep.mubr.f32.mxu0 0.0
      %1298 = vmatmul.mubr.f32.gmra.mrb[0].mxu0 %v1230
      %v1299 = vpop.f32.mrb[0].mxu0
      %v1300 = vadd.f32 0.0, %v1299
      %v1301 = vpop.f32.mrb[0].mxu0
      %1302 = vdwg.mxu0
      %v1303 = vadd.f32 %v1232, %v1300
      %v1304 = vmul.f32 %v1303, %v407
      %v1305 = vxor.u32 %v1304, 2147483648
      %v1306 = vmul.f32 %v1305, 1.442695
      %v1307 = vpow.pop %v1306
      %v1308 = vadd.f32 %v1307, 1.0
      %v1309 = vrcp.pop %v1308
      %v1310 = vmul.f32 1.0, %v1309
      %v1311 = vmul.f32 %v407, %v1310
      %v1312 = vadd.f32 %v1311, %v408
      %1313 = vrot.lane.b32.xlu0 %v1312, 64
      %v1314 = vpop.permute.xlu0 %1313
      %v1315 = vmul.f32 %v1312, %v1314
      %v1316 = vmul.f32 %v1312, %v1228
      %1317 = vrot.lane.b32.xlu0 %v1315, 32
      %v1318 = vpop.permute.xlu0 %1317
      %v1319 = vadd.f32 %v1316, %v1318
      %v1320 = vtanh.pop %v1319
      %v1321 = vmul.f32 %v1314, %v1320
      %1322 = vst [vmem:[%s817] sm:$0xff] %v1321
      %v1323 = vld [vmem:[%s819] sm:$0xff]
      %1324 = vmatprep.subr.mxu0 0.0
      %1325 = vmatpush1.msra.mxu0 %v1030
      %1326 = vmatprep.subr.mxu0 0.0
      %1327 = vmatpush1.msra.mxu0 %v1031
      %1328 = vmatprep.subr.mxu0 0.0
      %1329 = vmatpush1.msra.mxu0 %v1032
      %1330 = vmatprep.subr.mxu0 0.0
      %1331 = vmatpush1.msra.mxu0 %v1033
      %1332 = vmatprep.subr.mxu0 0.0
      %1333 = vmatpush1.msra.mxu0 %v1034
      %1334 = vmatprep.subr.mxu0 0.0
      %1335 = vmatpush1.msra.mxu0 %v1035
      %1336 = vmatprep.subr.mxu0 0.0
      %1337 = vmatpush1.msra.mxu0 %v1036
      %1338 = vmatprep.subr.mxu0 0.0
      %1339 = vmatpush1.msra.mxu0 %v1037
      %1340 = vmatprep.subr.mxu0 0.0
      %1341 = vmatpush1.msra.mxu0 %v1038
      %1342 = vmatprep.subr.mxu0 0.0
      %1343 = vmatpush1.msra.mxu0 %v1039
      %1344 = vmatprep.subr.mxu0 0.0
      %1345 = vmatpush1.msra.mxu0 %v1040
      %1346 = vmatprep.subr.mxu0 0.0
      %1347 = vmatpush1.msra.mxu0 %v1041
      %1348 = vmatprep.subr.mxu0 0.0
      %1349 = vmatpush1.msra.mxu0 %v1042
      %1350 = vmatprep.subr.mxu0 0.0
      %1351 = vmatpush1.msra.mxu0 %v1043
      %1352 = vmatprep.subr.mxu0 0.0
      %1353 = vmatpush1.msra.mxu0 %v1044
      %1354 = vmatprep.subr.mxu0 0.0
      %1355 = vmatpush1.msra.mxu0 %v1045
      %1356 = vmatprep.subr.mxu0 0.0
      %1357 = vmatpush1.msra.mxu0 0.0
      %1358 = vmatprep.subr.mxu0 0.0
      %1359 = vmatpush1.msra.mxu0 0.0
      %1360 = vmatprep.subr.mxu0 0.0
      %1361 = vmatpush1.msra.mxu0 0.0
      %1362 = vmatprep.subr.mxu0 0.0
      %1363 = vmatpush1.msra.mxu0 0.0
      %1364 = vmatprep.subr.mxu0 0.0
      %1365 = vmatpush1.msra.mxu0 0.0
      %1366 = vmatprep.subr.mxu0 0.0
      %1367 = vmatpush1.msra.mxu0 0.0
      %1368 = vmatprep.subr.mxu0 0.0
      %1369 = vmatpush1.msra.mxu0 0.0
      %1370 = vmatprep.subr.mxu0 0.0
      %1371 = vmatpush1.msra.mxu0 0.0
      %1372 = vmatprep.subr.mxu0 0.0
      %1373 = vmatpush1.msra.mxu0 0.0
      %1374 = vmatprep.subr.mxu0 0.0
      %1375 = vmatpush1.msra.mxu0 0.0
      %1376 = vmatprep.subr.mxu0 0.0
      %1377 = vmatpush1.msra.mxu0 0.0
      %1378 = vmatprep.subr.mxu0 0.0
      %1379 = vmatpush1.msra.mxu0 0.0
      %1380 = vmatprep.subr.mxu0 0.0
      %1381 = vmatpush1.msra.mxu0 0.0
      %1382 = vmatprep.subr.mxu0 0.0
      %1383 = vmatpush1.msra.mxu0 0.0
      %1384 = vmatprep.subr.mxu0 0.0
      %1385 = vmatpush1.msra.mxu0 0.0
      %1386 = vmatprep.subr.mxu0 0.0
      %1387 = vmatpush1.msra.mxu0 0.0
      %1388 = vmatprep.mubr.f32.mxu0 0.0
      %1389 = vmatmul.mubr.f32.gmra.mrb[0].mxu0 %v1321
      %v1390 = vpop.f32.mrb[0].mxu0
      %v1391 = vadd.f32 0.0, %v1390
      %v1392 = vpop.f32.mrb[0].mxu0
      %1393 = vdwg.mxu0
      %v1394 = vadd.f32 %v1323, %v1391
      %v1395 = vmul.f32 %v1394, %v407
      %v1396 = vxor.u32 %v1395, 2147483648
      %v1397 = vmul.f32 %v1396, 1.442695
      %v1398 = vpow.pop %v1397
      %v1399 = vadd.f32 %v1398, 1.0
      %v1400 = vrcp.pop %v1399
      %v1401 = vmul.f32 1.0, %v1400
      %v1402 = vmul.f32 %v407, %v1401
      %v1403 = vadd.f32 %v1402, %v408
      %1404 = vrot.lane.b32.xlu0 %v1403, 64
      %v1405 = vpop.permute.xlu0 %1404
      %v1406 = vmul.f32 %v1403, %v1405
      %v1407 = vmul.f32 %v1403, %v1319
      %1408 = vrot.lane.b32.xlu0 %v1406, 32
      %v1409 = vpop.permute.xlu0 %1408
      %v1410 = vadd.f32 %v1407, %v1409
      %v1411 = vtanh.pop %v1410
      %v1412 = vmul.f32 %v1405, %v1411
      %1413 = vst [vmem:[%s910] sm:$0xff] %v1412
      %1414 = vst [vmem:[%s1046] sm:$0xff] %v1412
      %1415 = vst [vmem:[%s1048] sm:$0xff] %v1410
      %v1416 = vld [vmem:[#allocation5] sm:$0xff]
      %v1417 = vld [vmem:[#allocation5 + $0x8] sm:$0xff]
      %v1418 = vld [vmem:[#allocation5 + $0x10] sm:$0xff]
      %v1419 = vld [vmem:[#allocation5 + $0x18] sm:$0xff]
      %v1420 = vld [vmem:[%s9] sm:$0xff]
      %v1421 = vld [vmem:[%s9 + $0x8] sm:$0xff]
      %v1422 = vld [vmem:[%s9 + $0x10] sm:$0xff]
      %v1423 = vld [vmem:[%s9 + $0x18] sm:$0xff]
      %v1424 = vld [vmem:[%s9 + $0x20] sm:$0xff]
      %v1425 = vld [vmem:[%s9 + $0x28] sm:$0xff]
      %v1426 = vld [vmem:[%s9 + $0x30] sm:$0xff]
      %v1427 = vld [vmem:[%s9 + $0x38] sm:$0xff]
      %v1428 = vld [vmem:[%s9 + $0x40] sm:$0xff]
      %v1429 = vld [vmem:[%s9 + $0x48] sm:$0xff]
      %v1430 = vld [vmem:[%s9 + $0x50] sm:$0xff]
      %v1431 = vld [vmem:[%s9 + $0x58] sm:$0xff]
      %v1432 = vld [vmem:[%s9 + $0x60] sm:$0xff]
      %v1433 = vld [vmem:[%s9 + $0x68] sm:$0xff]
      %v1434 = vld [vmem:[%s9 + $0x70] sm:$0xff]
      %v1435 = vld [vmem:[%s9 + $0x78] sm:$0xff]
      %v1436 = vld [vmem:[%s10] sm:$0x1]
      %v1438 = vlaneseq
      %v1439 = vshrl.u32 %v1438, 7
      %v1440 = vsub.s32 0, %v1439
      %v1441 = vrot.slane %v1436, %v1440
      %1443 = vmatprep.subr.mxu0 0.0
      %1444 = vmatpush1.msra.mxu0 %v1420
      %1445 = vmatprep.subr.mxu0 0.0
      %1446 = vmatpush1.msra.mxu0 %v1421
      %1447 = vmatprep.subr.mxu0 0.0
      %1448 = vmatpush1.msra.mxu0 %v1422
      %1449 = vmatprep.subr.mxu0 0.0
      %1450 = vmatpush1.msra.mxu0 %v1423
      %1451 = vmatprep.subr.mxu0 0.0
      %1452 = vmatpush1.msra.mxu0 %v1424
      %1453 = vmatprep.subr.mxu0 0.0
      %1454 = vmatpush1.msra.mxu0 %v1425
      %1455 = vmatprep.subr.mxu0 0.0
      %1456 = vmatpush1.msra.mxu0 %v1426
      %1457 = vmatprep.subr.mxu0 0.0
      %1458 = vmatpush1.msra.mxu0 %v1427
      %1459 = vmatprep.subr.mxu0 0.0
      %1460 = vmatpush1.msra.mxu0 %v1428
      %1461 = vmatprep.subr.mxu0 0.0
      %1462 = vmatpush1.msra.mxu0 %v1429
      %1463 = vmatprep.subr.mxu0 0.0
      %1464 = vmatpush1.msra.mxu0 %v1430
      %1465 = vmatprep.subr.mxu0 0.0
      %1466 = vmatpush1.msra.mxu0 %v1431
      %1467 = vmatprep.subr.mxu0 0.0
      %1468 = vmatpush1.msra.mxu0 %v1432
      %1469 = vmatprep.subr.mxu0 0.0
      %1470 = vmatpush1.msra.mxu0 %v1433
      %1471 = vmatprep.subr.mxu0 0.0
      %1472 = vmatpush1.msra.mxu0 %v1434
      %1473 = vmatprep.subr.mxu0 0.0
      %1474 = vmatpush1.msra.mxu0 %v1435
      %1475 = vmatprep.subr.mxu0 0.0
      %1476 = vmatpush1.msra.mxu0 0.0
      %1477 = vmatprep.subr.mxu0 0.0
      %1478 = vmatpush1.msra.mxu0 0.0
      %1479 = vmatprep.subr.mxu0 0.0
      %1480 = vmatpush1.msra.mxu0 0.0
      %1481 = vmatprep.subr.mxu0 0.0
      %1482 = vmatpush1.msra.mxu0 0.0
      %1483 = vmatprep.subr.mxu0 0.0
      %1484 = vmatpush1.msra.mxu0 0.0
      %1485 = vmatprep.subr.mxu0 0.0
      %1486 = vmatpush1.msra.mxu0 0.0
      %1487 = vmatprep.subr.mxu0 0.0
      %1488 = vmatpush1.msra.mxu0 0.0
      %1489 = vmatprep.subr.mxu0 0.0
      %1490 = vmatpush1.msra.mxu0 0.0
      %1491 = vmatprep.subr.mxu0 0.0
      %1492 = vmatpush1.msra.mxu0 0.0
      %1493 = vmatprep.subr.mxu0 0.0
      %1494 = vmatpush1.msra.mxu0 0.0
      %1495 = vmatprep.subr.mxu0 0.0
      %1496 = vmatpush1.msra.mxu0 0.0
      %1497 = vmatprep.subr.mxu0 0.0
      %1498 = vmatpush1.msra.mxu0 0.0
      %1499 = vmatprep.subr.mxu0 0.0
      %1500 = vmatpush1.msra.mxu0 0.0
      %1501 = vmatprep.subr.mxu0 0.0
      %1502 = vmatpush1.msra.mxu0 0.0
      %1503 = vmatprep.subr.mxu0 0.0
      %1504 = vmatpush1.msra.mxu0 0.0
      %1505 = vmatprep.subr.mxu0 0.0
      %1506 = vmatpush1.msra.mxu0 0.0
      %1507 = vmatprep.mubr.f32.mxu0 0.0
      %1508 = vmatmul.mubr.f32.gmra.mrb[0].mxu0 %v1416
      %v1509 = vpop.f32.mrb[0].mxu0
      %v1510 = vadd.f32 %v1441, %v1509
      %v1511 = vpop.f32.mrb[0].mxu0
      %1512 = vmatprep.mubr.f32.mxu0 0.0
      %1513 = vmatmul.mubr.f32.gmra.mrb[0].mxu0 %v1417
      %v1514 = vpop.f32.mrb[0].mxu0
      %v1515 = vadd.f32 %v1441, %v1514
      %v1516 = vpop.f32.mrb[0].mxu0
      %1517 = vmatprep.mubr.f32.mxu0 0.0
      %1518 = vmatmul.mubr.f32.gmra.mrb[0].mxu0 %v1418
      %v1519 = vpop.f32.mrb[0].mxu0
      %v1520 = vadd.f32 %v1441, %v1519
      %v1521 = vpop.f32.mrb[0].mxu0
      %1522 = vmatprep.mubr.f32.mxu0 0.0
      %1523 = vmatmul.mubr.f32.gmra.mrb[0].mxu0 %v1419
      %v1524 = vpop.f32.mrb[0].mxu0
      %v1525 = vadd.f32 %v1441, %v1524
      %v1526 = vpop.f32.mrb[0].mxu0
      %1527 = vdwg.mxu0
      %1528 = vst [vmem:[%s388] sm:$0xff] %v1510
      %1529 = vst [vmem:[%s388 + $0x8] sm:$0xff] %v1515
      %1530 = vst [vmem:[%s388 + $0x10] sm:$0xff] %v1520
      %1531 = vst [vmem:[%s388 + $0x18] sm:$0xff] %v1525
      %s1532 = smul.u32 4, %s22
      %p1533 = scmp.lt.s32.totalorder %s1532, 7
      %s1534 = scalar_select %p1533, %s1532, 7
      %s1535 = smul.addr %s1534, 8
      %s1536 = scalar_lea.vmem %s11, %s1535
      // Predicated region
      $region69: #{lstm_forward.1} parent=63 // pred_check
        %p1537 = pneg %p276
      $region70: #{lstm_forward.1} parent=63 // pred_check_branch
        %1539 = sbr.rel (%p1537) target = $region72
      $region71: #{lstm_forward.1} parent=63 // pred_region
        %s1540 = smul.u32 4, %s22
      $region72: #{lstm_forward.1} parent=63 // pred_fallthru
        _
    $region64: #{lstm_forward.1} parent=5 // pred_fallthru
      _
    %p1541 = scmp.le.s32.totalorder 2, %s17
    // Predicated region
    $region73: #{lstm_forward.1} parent=5 // pred_check
      %p1542 = pneg %p1541
    $region74: #{lstm_forward.1} parent=5 // pred_check_branch
      %1544 = sbr.rel (%p1542) target = $region76
    $region75: #{lstm_forward.1} parent=5 // pred_region
      %s1545 = ssub.s32 %s17, 2
      // Predicated region
      $region77: #{lstm_forward.1} parent=75 // pred_check
        %p1546 = pneg %p282
      $region78: #{lstm_forward.1} parent=75 // pred_check_branch
        %1548 = sbr.rel (%p1546) target = $region80
      $region79: #{lstm_forward.1} parent=75 // pred_region
        %s1549 = smul.u32 4, %s23
        %p1550 = scmp.lt.s32.totalorder %s1549, 7
        %s1551 = scalar_select %p1550, %s1549, 7
        %s1552 = smul.addr %s1551, 8
        %s1553 = scalar_lea.vmem %s11, %s1552
      $region80: #{lstm_forward.1} parent=75 // pred_fallthru
        _
    $region76: #{lstm_forward.1} parent=5 // pred_fallthru
      _
  $region6: #{lstm_forward.1} parent=0 // loop_footer
    %s21 = sadd.s32 1, %s17
  $region7: #{lstm_forward.1} parent=0 // loop_footer_branch
    %16 = sbr.rel target = $region3
  $region8: #{lstm_forward.1} parent=0 // loop_exit
    _

</llo_original>
